<compile_context>
chip_gen: v7x
topology: tpu7x:2x2x1
jax: 0.10.0
libtpu: 0.0.40
codegen_flags: <defaults>
</compile_context>

<pallas_src>
import functools

import jax
import jax.numpy as jnp
from jax.experimental import pallas as pl
from jax.experimental.pallas import tpu as pltpu


# ---------------------------------------------------------------------------
# Kernels
# ---------------------------------------------------------------------------

def _banded_kernel(c1_ref, c2_ref, x1_ref, x2_ref, o_ref, *, n_diags):
    """out[:, j] = 1 + sum_d ( x1[:, j-d]*W1[j-d, j] + x2[:, j-d]*W2[j-d, j] ).

    c{1,2}_ref: (n_diags, N) source-indexed coefficient tables,
                c[d, i] = (mask*W)[i, i+d]  (0 for i >= N-d).
    x{1,2}_ref: (bt, N) batch tile of inputs.

    Per diagonal d > 0:  t_d = x1*c1[d] + x2*c2[d]   (VPU FMAs)
                         acc += roll(t_d, d)          (one XLU lane rotation)
    Wrapped lanes are multiplied by the zero-padded coefficients, so no extra
    select/iota masking is required (same degenerate-input behaviour as the
    reference matmul, which also multiplies those x entries by zero weights).
    """
    x1 = x1_ref[...].astype(jnp.float32)
    x2 = x2_ref[...].astype(jnp.float32)
    c1 = c1_ref[...]
    c2 = c2_ref[...]

    # d = 0 term: no shift needed
    acc = 1.0 + x1 * c1[0:1, :] + x2 * c2[0:1, :]

    for d in range(1, n_diags):
        t = x1 * c1[d:d + 1, :] + x2 * c2[d:d + 1, :]
        acc = acc + pltpu.roll(t, shift=d, axis=1)

    o_ref[...] = acc.astype(o_ref.dtype)


def _dense_kernel(x1_ref, x2_ref, w1_ref, w2_ref, o_ref):
    """Fallback for wide bands (lag ~ N): out = 1 + x1 @ (mask*W1) + x2 @ (mask*W2)."""
    acc = jnp.dot(x1_ref[...], w1_ref[...], preferred_element_type=jnp.float32)
    acc = acc + jnp.dot(x2_ref[...], w2_ref[...], preferred_element_type=jnp.float32)
    o_ref[...] = (1.0 + acc).astype(o_ref.dtype)


# ---------------------------------------------------------------------------
# Wrappers
# ---------------------------------------------------------------------------

def _batch_tile(batch, n, *, n_streamed=3, vmem_budget=12 << 20):
    """Largest batch tile that divides `batch` while keeping the double-buffered
    streamed tiles (x1, x2, out) inside a conservative VMEM budget that fits the
    scoped-VMEM defaults on v5e/v6e/v7x."""
    per_row = n_streamed * 2 * n * 4            # 3 arrays, double-buffered, f32
    cap = max(8, vmem_budget // per_row)
    for bt in (1024, 512, 256, 128, 64, 32, 16, 8):
        if bt <= cap and batch % bt == 0:
            return bt
    return batch                                # block dim == array dim is always legal


def _forward_banded(x1, x2, coeffs1, coeffs2):
    B, N = x1.shape
    D = coeffs1.shape[0]
    bt = _batch_tile(B, N)
    grid = (B // bt,)

    flops = 4 * B * N * D + B * N               # 2 mul + 2 add per diagonal + bias
    bytes_accessed = 4 * (3 * B * N + 2 * D * N)

    return pl.pallas_call(
        functools.partial(_banded_kernel, n_diags=D),
        out_shape=jax.ShapeDtypeStruct((B, N), jnp.float32),
        grid=grid,
        in_specs=[
            pl.BlockSpec((D, N), lambda i: (0, 0)),     # coefficient tables, pinned
            pl.BlockSpec((D, N), lambda i: (0, 0)),
            pl.BlockSpec((bt, N), lambda i: (i, 0)),    # streamed batch tiles
            pl.BlockSpec((bt, N), lambda i: (i, 0)),
        ],
        out_specs=pl.BlockSpec((bt, N), lambda i: (i, 0)),
        compiler_params=pltpu.CompilerParams(dimension_semantics=("parallel",)),
        cost_estimate=pl.CostEstimate(
            flops=flops, transcendentals=0, bytes_accessed=bytes_accessed),
    )(coeffs1, coeffs2, x1, x2)


def _forward_dense(x1, x2, w1m, w2m):
    B, N = x1.shape
    bt = _batch_tile(B, N)
    grid = (B // bt,)

    flops = 2 * 2 * B * N * N + B * N
    bytes_accessed = 4 * (3 * B * N + 2 * N * N)

    return pl.pallas_call(
        _dense_kernel,
        out_shape=jax.ShapeDtypeStruct((B, N), jnp.float32),
        grid=grid,
        in_specs=[
            pl.BlockSpec((bt, N), lambda i: (i, 0)),    # streamed batch tiles
            pl.BlockSpec((bt, N), lambda i: (i, 0)),
            pl.BlockSpec((N, N), lambda i: (0, 0)),     # pre-masked weights, pinned
            pl.BlockSpec((N, N), lambda i: (0, 0)),
        ],
        out_specs=pl.BlockSpec((bt, N), lambda i: (i, 0)),
        compiler_params=pltpu.CompilerParams(dimension_semantics=("parallel",)),
        cost_estimate=pl.CostEstimate(
            flops=flops, transcendentals=0, bytes_accessed=bytes_accessed),
    )(x1, x2, w1m, w2m)


def fhat2_diag_forward(x1, x2, params):
    """Forward pass of fnNetwork_fhat2_diag.  params from preprocess_params()."""
    coeffs1, coeffs2, w1m, w2m = params
    N = x1.shape[1]
    D = coeffs1.shape[0]
    # banded (roll + FMA) path only pays when the band is narrow relative to N
    if D * 8 <= N:
        return _forward_banded(x1, x2, coeffs1, coeffs2)
    return _forward_dense(x1, x2, w1m, w2m)


# ---------------------------------------------------------------------------
# Parameter construction (matches the torch __init__) + one-time preprocessing
# ---------------------------------------------------------------------------

def make_params(lag, n, init_vals, key):
    """Build mask, w_1_mat, w_2_mat exactly as the torch __init__ does."""
    k1, k2 = jax.random.split(key)
    w_1 = jax.random.uniform(k1, (n,), jnp.float32,
                             minval=init_vals[0][0], maxval=init_vals[0][1])
    w_2 = jax.random.uniform(k2, (n,), jnp.float32,
                             minval=init_vals[1][0], maxval=init_vals[1][1])

    idx = jnp.arange(n)
    diff = idx[None, :] - idx[:, None]                  # diff[i, j] = j - i
    mask = ((diff >= 0) & (diff <= lag)).astype(jnp.float32)

    def toeplitz_upper(w):
        return jnp.where(diff >= 0, w[jnp.clip(diff, 0, n - 1)], 0.0).astype(jnp.float32)

    return mask, toeplitz_upper(w_1), toeplitz_upper(w_2)


def preprocess_params(mask, w1_mat, w2_mat, lag):
    """Fold the static mask into the weights once; extract source-indexed
    coefficient tables c[d, i] = (mask*W)[i, i+d] (zero-padded for i >= N-d)."""
    w1m = (mask * w1_mat).astype(jnp.float32)
    w2m = (mask * w2_mat).astype(jnp.float32)

    def band_coeffs(wm):
        rows = []
        for d in range(lag + 1):
            diag = jnp.diagonal(wm, offset=d)                       # wm[i, i+d], length n-d
            rows.append(jnp.concatenate([diag, jnp.zeros((d,), wm.dtype)]))
        return jnp.stack(rows, axis=0)                              # (lag+1, n)

    return band_coeffs(w1m), band_coeffs(w2m), w1m, w2m


def reference_forward(x1, x2, mask, w1_mat, w2_mat):
    return 1.0 + x1 @ (mask * w1_mat) + x2 @ (mask * w2_mat)


# ---------------------------------------------------------------------------
# Demo / self-test
# ---------------------------------------------------------------------------

if __name__ == "__main__":
    key = jax.random.PRNGKey(0)
    k_params, k_x1, k_x2 = jax.random.split(key, 3)

    lag = 3
    B, N = 256, 256                     # small, TPU-friendly (lane dim multiple of 128)
    init_vals = [(-0.1, 0.1), (-0.1, 0.1)]

    mask, w1_mat, w2_mat = make_params(lag, N, init_vals, k_params)
    params = preprocess_params(mask, w1_mat, w2_mat, lag)

    x1 = jax.random.normal(k_x1, (B, N), jnp.float32)
    x2 = jax.random.normal(k_x2, (B, N), jnp.float32)

    ref = reference_forward(x1, x2, mask, w1_mat, w2_mat)

    # Primary (banded / roll+FMA) path.
    out = jax.block_until_ready(fhat2_diag_forward(x1, x2, params))
    assert out.shape == (B, N)
    assert jnp.allclose(out, ref, atol=1e-4, rtol=1e-4)

    # Dense fused-matmul fallback path (used when lag ~ N).
    out_dense = jax.block_until_ready(_forward_dense(x1, x2, params[2], params[3]))
    assert jnp.allclose(out_dense, ref, atol=1e-4, rtol=1e-4)

    print("KERNEL_OK")
</pallas_src>

<mosaic_0001>
module attributes {stable_mosaic.version = 11 : i64} {
  func.func @_banded_kernel(%arg0: i32, %arg1: memref<4x256xf32, #tpu.memory_space<vmem>>, %arg2: memref<4x256xf32, #tpu.memory_space<vmem>>, %arg3: memref<256x256xf32, #tpu.memory_space<vmem>>, %arg4: memref<256x256xf32, #tpu.memory_space<vmem>>, %arg5: memref<256x256xf32, #tpu.memory_space<vmem>>) attributes {dimension_semantics = [#tpu.dimension_semantics<parallel>], iteration_bounds = array<i64: 1>, scalar_prefetch = 0 : i64, scratch_operands = 0 : i64, tpu.core_type = #tpu.core_type<tc>, window_params = [{pipeline_mode = #tpu.pipeline_mode<synchronous>, transform_indices = @transform_0, window_bounds = array<i64: 4, 256>}, {pipeline_mode = #tpu.pipeline_mode<synchronous>, transform_indices = @transform_1, window_bounds = array<i64: 4, 256>}, {transform_indices = @transform_2, window_bounds = array<i64: 256, 256>}, {transform_indices = @transform_3, window_bounds = array<i64: 256, 256>}, {transform_indices = @transform_4, window_bounds = array<i64: 256, 256>}]} {
    %c0 = arith.constant 0 : index
    %c0_0 = arith.constant 0 : index
    %0 = vector.load %arg3[%c0, %c0_0] : memref<256x256xf32, #tpu.memory_space<vmem>>, vector<256x256xf32>
    %c0_1 = arith.constant 0 : index
    %c0_2 = arith.constant 0 : index
    %1 = vector.load %arg4[%c0_1, %c0_2] : memref<256x256xf32, #tpu.memory_space<vmem>>, vector<256x256xf32>
    %c0_3 = arith.constant 0 : index
    %c0_4 = arith.constant 0 : index
    %2 = vector.load %arg1[%c0_3, %c0_4] : memref<4x256xf32, #tpu.memory_space<vmem>>, vector<4x256xf32>
    %c0_5 = arith.constant 0 : index
    %c0_6 = arith.constant 0 : index
    %3 = vector.load %arg2[%c0_5, %c0_6] : memref<4x256xf32, #tpu.memory_space<vmem>>, vector<4x256xf32>
    %4 = vector.extract_strided_slice %2 {offsets = [0, 0], sizes = [1, 256], strides = [1, 1]} : vector<4x256xf32> to vector<1x256xf32>
    %5 = vector.broadcast %4 : vector<1x256xf32> to vector<256x256xf32>
    %6 = arith.mulf %0, %5 : vector<256x256xf32>
    %cst = arith.constant 1.000000e+00 : f32
    %7 = vector.broadcast %cst : f32 to vector<256x256xf32>
    %8 = arith.addf %7, %6 : vector<256x256xf32>
    %9 = vector.extract_strided_slice %3 {offsets = [0, 0], sizes = [1, 256], strides = [1, 1]} : vector<4x256xf32> to vector<1x256xf32>
    %10 = vector.broadcast %9 : vector<1x256xf32> to vector<256x256xf32>
    %11 = arith.mulf %1, %10 : vector<256x256xf32>
    %12 = arith.addf %8, %11 : vector<256x256xf32>
    %13 = vector.extract_strided_slice %2 {offsets = [1, 0], sizes = [1, 256], strides = [1, 1]} : vector<4x256xf32> to vector<1x256xf32>
    %14 = vector.broadcast %13 : vector<1x256xf32> to vector<256x256xf32>
    %15 = arith.mulf %0, %14 : vector<256x256xf32>
    %16 = vector.extract_strided_slice %3 {offsets = [1, 0], sizes = [1, 256], strides = [1, 1]} : vector<4x256xf32> to vector<1x256xf32>
    %17 = vector.broadcast %16 : vector<1x256xf32> to vector<256x256xf32>
    %18 = arith.mulf %1, %17 : vector<256x256xf32>
    %19 = arith.addf %15, %18 : vector<256x256xf32>
    %c1_i32 = arith.constant 1 : i32
    %20 = tpu.dynamic_rotate %19 by %c1_i32 dim 1 : vector<256x256xf32>, i32 -> vector<256x256xf32>
    %21 = arith.addf %12, %20 : vector<256x256xf32>
    %22 = vector.extract_strided_slice %2 {offsets = [2, 0], sizes = [1, 256], strides = [1, 1]} : vector<4x256xf32> to vector<1x256xf32>
    %23 = vector.broadcast %22 : vector<1x256xf32> to vector<256x256xf32>
    %24 = arith.mulf %0, %23 : vector<256x256xf32>
    %25 = vector.extract_strided_slice %3 {offsets = [2, 0], sizes = [1, 256], strides = [1, 1]} : vector<4x256xf32> to vector<1x256xf32>
    %26 = vector.broadcast %25 : vector<1x256xf32> to vector<256x256xf32>
    %27 = arith.mulf %1, %26 : vector<256x256xf32>
    %28 = arith.addf %24, %27 : vector<256x256xf32>
    %c2_i32 = arith.constant 2 : i32
    %29 = tpu.dynamic_rotate %28 by %c2_i32 dim 1 : vector<256x256xf32>, i32 -> vector<256x256xf32>
    %30 = arith.addf %21, %29 : vector<256x256xf32>
    %31 = vector.extract_strided_slice %2 {offsets = [3, 0], sizes = [1, 256], strides = [1, 1]} : vector<4x256xf32> to vector<1x256xf32>
    %32 = vector.broadcast %31 : vector<1x256xf32> to vector<256x256xf32>
    %33 = arith.mulf %0, %32 : vector<256x256xf32>
    %34 = vector.extract_strided_slice %3 {offsets = [3, 0], sizes = [1, 256], strides = [1, 1]} : vector<4x256xf32> to vector<1x256xf32>
    %35 = vector.broadcast %34 : vector<1x256xf32> to vector<256x256xf32>
    %36 = arith.mulf %1, %35 : vector<256x256xf32>
    %37 = arith.addf %33, %36 : vector<256x256xf32>
    %c3_i32 = arith.constant 3 : i32
    %38 = tpu.dynamic_rotate %37 by %c3_i32 dim 1 : vector<256x256xf32>, i32 -> vector<256x256xf32>
    %39 = arith.addf %30, %38 : vector<256x256xf32>
    %c0_7 = arith.constant 0 : index
    %c0_8 = arith.constant 0 : index
    %40 = vector.load %arg5[%c0_7, %c0_8] : memref<256x256xf32, #tpu.memory_space<vmem>>, vector<256x256xf32>
    tpu.vector_store %arg5[%c0_7, %c0_8], %39 {strides = array<i32>} : memref<256x256xf32, #tpu.memory_space<vmem>>, vector<256x256xf32>,
    return
  }
  func.func @transform_0(%arg0: i32) -> (i32, i32) {
    %c0_i32 = arith.constant 0 : i32
    %c0_i32_0 = arith.constant 0 : i32
    %c0_i32_1 = arith.constant 0 : i32
    return %c0_i32, %c0_i32_0 : i32, i32
  }
  func.func @transform_1(%arg0: i32) -> (i32, i32) {
    %c0_i32 = arith.constant 0 : i32
    %c0_i32_0 = arith.constant 0 : i32
    %c0_i32_1 = arith.constant 0 : i32
    return %c0_i32, %c0_i32_0 : i32, i32
  }
  func.func @transform_2(%arg0: i32) -> (i32, i32) {
    %c0_i32 = arith.constant 0 : i32
    %c0_i32_0 = arith.constant 0 : i32
    return %arg0, %c0_i32 : i32, i32
  }
  func.func @transform_3(%arg0: i32) -> (i32, i32) {
    %c0_i32 = arith.constant 0 : i32
    %c0_i32_0 = arith.constant 0 : i32
    return %arg0, %c0_i32 : i32, i32
  }
  func.func @transform_4(%arg0: i32) -> (i32, i32) {
    %c0_i32 = arith.constant 0 : i32
    %c0_i32_0 = arith.constant 0 : i32
    return %arg0, %c0_i32 : i32, i32
  }
}

</mosaic_0001>

<llo_original>
// kernel: tpu_custom_call.1
$region0: #{tpu_custom_call.1}
  #allocation0 [shape = 'u32[]', space=smem, size = 0x4, offset = 0x4, fixed_abs, tag = 'smem constant byte address 0x4 - core index']
  #allocation1 [shape = 'u32[144,128]{1,0:T(1,128)}', space=vmem, size = 0x12000, scoped, tag = 'internal scratch']
  %s0 = inlined_call_operand.hbm [shape: f32[4,256], index: 0, kind: input, shape index: {}]
  %s1 = inlined_call_operand.hbm [shape: f32[4,256], index: 1, kind: input, shape index: {}]
  %s2 = inlined_call_operand.hbm [shape: f32[256,256], index: 2, kind: input, shape index: {}]
  %s3 = inlined_call_operand.hbm [shape: f32[256,256], index: 3, kind: input, shape index: {}]
  %s4 = inlined_call_operand.hbm [shape: f32[256,256], index: 4, kind: output, shape index: {}]
  %s5 = sld [smem:[#allocation0]]
  $region42: #{tpu_custom_call.1} parent=0
    _
  %s7 = ssub.s32 1, %s5
  %s8 = scalar_select 0, %s7, %s5
  $region1: #{tpu_custom_call.1} parent=0
    #allocation2 [shape = 'u8[4096]{0}', space=vmem, size = 0x1000, scoped, tag = 'input window, operand 0, single buffered']
    #allocation3 [shape = 's32[1]{0}', space=sflag, size = 0x4, scoped, tag = 'scoped memory for tpu_custom_call.1']
    #allocation4 [shape = 's32[1]{0}', space=sflag, size = 0x4, scoped, tag = 'scoped memory for tpu_custom_call.1']
    #allocation5 [shape = 'u8[4096]{0}', space=vmem, size = 0x1000, scoped, tag = 'input window, operand 1, single buffered']
    #allocation6 [shape = 's32[1]{0}', space=sflag, size = 0x4, scoped, tag = 'scoped memory for tpu_custom_call.1']
    #allocation7 [shape = 'u8[262144]{0}', space=vmem, size = 0x40000, scoped, tag = 'input window, operand 2, single buffered']
    #allocation8 [shape = 'u8[262144]{0}', space=vmem, size = 0x40000, scoped, tag = 'input window, operand 3, single buffered']
    #allocation9 [shape = 's32[1]{0}', space=sflag, size = 0x4, scoped, tag = 'scoped memory for tpu_custom_call.1']
    #allocation10 [shape = 'u8[262144]{0}', space=vmem, size = 0x40000, scoped, tag = 'output window, operand 0, single buffered']
    %9 = vsyncpa [#allocation3], 0
    %10 = vsyncpa [#allocation6], 0
    %11 = vsyncpa [#allocation9], 0
    %12 = vsyncpa [#allocation4], 0
    // Predicated region
    $region2: #{tpu_custom_call.1} parent=1 // pred_check
      _
    $region3: #{tpu_custom_call.1} parent=1 // pred_check_branch
      %14 = sbr.rel (0) target = $region5
    $region4: #{tpu_custom_call.1} parent=1 // pred_region
      %s16 = ssub.s32 128, 128
      %17 = vsyncadd [#allocation3], %s16
      %s19 = sshll.u32 [#allocation2], 4
      %s20 = int_to_ptr.vmem [resolvable:$true] %s19
      %22 = dma.hbm_to_vmem [thread:$0]  %s0, 128, %s20, [#allocation3]
    $region5: #{tpu_custom_call.1} parent=1 // pred_fallthru
      _
    // Predicated region
    $region6: #{tpu_custom_call.1} parent=1 // pred_check
      _
    $region7: #{tpu_custom_call.1} parent=1 // pred_check_branch
      %24 = sbr.rel (0) target = $region9
    $region8: #{tpu_custom_call.1} parent=1 // pred_region
      %s26 = ssub.s32 128, 128
      %27 = vsyncadd [#allocation6], %s26
      %s29 = sshll.u32 [#allocation5], 4
      %s30 = int_to_ptr.vmem [resolvable:$true] %s29
      %32 = dma.hbm_to_vmem [thread:$0]  %s1, 128, %s30, [#allocation6]
    $region9: #{tpu_custom_call.1} parent=1 // pred_fallthru
      _
    // Predicated region
    $region10: #{tpu_custom_call.1} parent=1 // pred_check
      _
    $region11: #{tpu_custom_call.1} parent=1 // pred_check_branch
      %34 = sbr.rel (0) target = $region13
    $region12: #{tpu_custom_call.1} parent=1 // pred_region
      %s36 = ssub.s32 8192, 8192
      %37 = vsyncadd [#allocation6], %s36
      %s38 = sshll.u32 [#allocation7], 4
      %s39 = int_to_ptr.vmem [resolvable:$true] %s38
      %44 = dma.hbm_to_vmem [thread:$0]  %s2, 8192, %s39, [#allocation6], 256, 256, 16
    $region13: #{tpu_custom_call.1} parent=1 // pred_fallthru
      _
    // Predicated region
    $region14: #{tpu_custom_call.1} parent=1 // pred_check
      _
    $region15: #{tpu_custom_call.1} parent=1 // pred_check_branch
      %46 = sbr.rel (0) target = $region17
    $region16: #{tpu_custom_call.1} parent=1 // pred_region
      %s48 = ssub.s32 8192, 8192
      %49 = vsyncadd [#allocation9], %s48
      %s50 = sshll.u32 [#allocation8], 4
      %s51 = int_to_ptr.vmem [resolvable:$true] %s50
      %56 = dma.hbm_to_vmem [thread:$0]  %s3, 8192, %s51, [#allocation9], 256, 256, 16
    $region17: #{tpu_custom_call.1} parent=1 // pred_fallthru
      _
    // Predicated region
    $region18: #{tpu_custom_call.1} parent=1 // pred_check
      _
    $region19: #{tpu_custom_call.1} parent=1 // pred_check_branch
      %58 = sbr.rel (0) target = $region21
    $region20: #{tpu_custom_call.1} parent=1 // pred_region
      %59 = dma.done [#allocation3], 128
    $region21: #{tpu_custom_call.1} parent=1 // pred_fallthru
      _
    // Predicated region
    $region22: #{tpu_custom_call.1} parent=1 // pred_check
      _
    $region23: #{tpu_custom_call.1} parent=1 // pred_check_branch
      %61 = sbr.rel (0) target = $region25
    $region24: #{tpu_custom_call.1} parent=1 // pred_region
      %62 = dma.done [#allocation6], 128
    $region25: #{tpu_custom_call.1} parent=1 // pred_fallthru
      _
    // Predicated region
    $region26: #{tpu_custom_call.1} parent=1 // pred_check
      _
    $region27: #{tpu_custom_call.1} parent=1 // pred_check_branch
      %64 = sbr.rel (0) target = $region29
    $region28: #{tpu_custom_call.1} parent=1 // pred_region
      %65 = dma.done [#allocation6], 8192
    $region29: #{tpu_custom_call.1} parent=1 // pred_fallthru
      _
    // Predicated region
    $region30: #{tpu_custom_call.1} parent=1 // pred_check
      _
    $region31: #{tpu_custom_call.1} parent=1 // pred_check_branch
      %67 = sbr.rel (0) target = $region33
    $region32: #{tpu_custom_call.1} parent=1 // pred_region
      %68 = dma.done [#allocation9], 8192
    $region33: #{tpu_custom_call.1} parent=1 // pred_fallthru
      _
    %v69 = vld [vmem:[#allocation7] sm:$0xff]
    %v70 = vld [vmem:[#allocation7 + $0x8] sm:$0xff]
    %v71 = vld [vmem:[#allocation7 + $0x10] sm:$0xff]
    %v72 = vld [vmem:[#allocation7 + $0x18] sm:$0xff]
    %v73 = vld [vmem:[#allocation7 + $0x20] sm:$0xff]
    %v74 = vld [vmem:[#allocation7 + $0x28] sm:$0xff]
    %v75 = vld [vmem:[#allocation7 + $0x30] sm:$0xff]
    %v76 = vld [vmem:[#allocation7 + $0x38] sm:$0xff]
    %v77 = vld [vmem:[#allocation7 + $0x40] sm:$0xff]
    %v78 = vld [vmem:[#allocation7 + $0x48] sm:$0xff]
    %v79 = vld [vmem:[#allocation7 + $0x50] sm:$0xff]
    %v80 = vld [vmem:[#allocation7 + $0x58] sm:$0xff]
    %v81 = vld [vmem:[#allocation7 + $0x60] sm:$0xff]
    %v82 = vld [vmem:[#allocation7 + $0x68] sm:$0xff]
    %v83 = vld [vmem:[#allocation7 + $0x70] sm:$0xff]
    %v84 = vld [vmem:[#allocation7 + $0x78] sm:$0xff]
    %v85 = vld [vmem:[#allocation7 + $0x80] sm:$0xff]
    %v86 = vld [vmem:[#allocation7 + $0x88] sm:$0xff]
    %v87 = vld [vmem:[#allocation7 + $0x90] sm:$0xff]
    %v88 = vld [vmem:[#allocation7 + $0x98] sm:$0xff]
    %v89 = vld [vmem:[#allocation7 + $0xa0] sm:$0xff]
    %v90 = vld [vmem:[#allocation7 + $0xa8] sm:$0xff]
    %v91 = vld [vmem:[#allocation7 + $0xb0] sm:$0xff]
    %v92 = vld [vmem:[#allocation7 + $0xb8] sm:$0xff]
    %v93 = vld [vmem:[#allocation7 + $0xc0] sm:$0xff]
    %v94 = vld [vmem:[#allocation7 + $0xc8] sm:$0xff]
    %v95 = vld [vmem:[#allocation7 + $0xd0] sm:$0xff]
    %v96 = vld [vmem:[#allocation7 + $0xd8] sm:$0xff]
    %v97 = vld [vmem:[#allocation7 + $0xe0] sm:$0xff]
    %v98 = vld [vmem:[#allocation7 + $0xe8] sm:$0xff]
    %v99 = vld [vmem:[#allocation7 + $0xf0] sm:$0xff]
    %v100 = vld [vmem:[#allocation7 + $0xf8] sm:$0xff]
    %v101 = vld [vmem:[#allocation7 + $0x100] sm:$0xff]
    %v102 = vld [vmem:[#allocation7 + $0x108] sm:$0xff]
    %v103 = vld [vmem:[#allocation7 + $0x110] sm:$0xff]
    %v104 = vld [vmem:[#allocation7 + $0x118] sm:$0xff]
    %v105 = vld [vmem:[#allocation7 + $0x120] sm:$0xff]
    %v106 = vld [vmem:[#allocation7 + $0x128] sm:$0xff]
    %v107 = vld [vmem:[#allocation7 + $0x130] sm:$0xff]
    %v108 = vld [vmem:[#allocation7 + $0x138] sm:$0xff]
    %v109 = vld [vmem:[#allocation7 + $0x140] sm:$0xff]
    %v110 = vld [vmem:[#allocation7 + $0x148] sm:$0xff]
    %v111 = vld [vmem:[#allocation7 + $0x150] sm:$0xff]
    %v112 = vld [vmem:[#allocation7 + $0x158] sm:$0xff]
    %v113 = vld [vmem:[#allocation7 + $0x160] sm:$0xff]
    %v114 = vld [vmem:[#allocation7 + $0x168] sm:$0xff]
    %v115 = vld [vmem:[#allocation7 + $0x170] sm:$0xff]
    %v116 = vld [vmem:[#allocation7 + $0x178] sm:$0xff]
    %v117 = vld [vmem:[#allocation7 + $0x180] sm:$0xff]
    %v118 = vld [vmem:[#allocation7 + $0x188] sm:$0xff]
    %v119 = vld [vmem:[#allocation7 + $0x190] sm:$0xff]
    %v120 = vld [vmem:[#allocation7 + $0x198] sm:$0xff]
    %v121 = vld [vmem:[#allocation7 + $0x1a0] sm:$0xff]
    %v122 = vld [vmem:[#allocation7 + $0x1a8] sm:$0xff]
    %v123 = vld [vmem:[#allocation7 + $0x1b0] sm:$0xff]
    %v124 = vld [vmem:[#allocation7 + $0x1b8] sm:$0xff]
    %v125 = vld [vmem:[#allocation7 + $0x1c0] sm:$0xff]
    %v126 = vld [vmem:[#allocation7 + $0x1c8] sm:$0xff]
    %v127 = vld [vmem:[#allocation7 + $0x1d0] sm:$0xff]
    %v128 = vld [vmem:[#allocation7 + $0x1d8] sm:$0xff]
    %v129 = vld [vmem:[#allocation7 + $0x1e0] sm:$0xff]
    %v130 = vld [vmem:[#allocation7 + $0x1e8] sm:$0xff]
    %v131 = vld [vmem:[#allocation7 + $0x1f0] sm:$0xff]
    %v132 = vld [vmem:[#allocation7 + $0x1f8] sm:$0xff]
    %v133 = vld [vmem:[#allocation8] sm:$0xff]
    %v134 = vld [vmem:[#allocation8 + $0x8] sm:$0xff]
    %v135 = vld [vmem:[#allocation8 + $0x10] sm:$0xff]
    %v136 = vld [vmem:[#allocation8 + $0x18] sm:$0xff]
    %v137 = vld [vmem:[#allocation8 + $0x20] sm:$0xff]
    %v138 = vld [vmem:[#allocation8 + $0x28] sm:$0xff]
    %v139 = vld [vmem:[#allocation8 + $0x30] sm:$0xff]
    %v140 = vld [vmem:[#allocation8 + $0x38] sm:$0xff]
    %v141 = vld [vmem:[#allocation8 + $0x40] sm:$0xff]
    %v142 = vld [vmem:[#allocation8 + $0x48] sm:$0xff]
    %v143 = vld [vmem:[#allocation8 + $0x50] sm:$0xff]
    %v144 = vld [vmem:[#allocation8 + $0x58] sm:$0xff]
    %v145 = vld [vmem:[#allocation8 + $0x60] sm:$0xff]
    %v146 = vld [vmem:[#allocation8 + $0x68] sm:$0xff]
    %v147 = vld [vmem:[#allocation8 + $0x70] sm:$0xff]
    %v148 = vld [vmem:[#allocation8 + $0x78] sm:$0xff]
    %v149 = vld [vmem:[#allocation8 + $0x80] sm:$0xff]
    %v150 = vld [vmem:[#allocation8 + $0x88] sm:$0xff]
    %v151 = vld [vmem:[#allocation8 + $0x90] sm:$0xff]
    %v152 = vld [vmem:[#allocation8 + $0x98] sm:$0xff]
    %v153 = vld [vmem:[#allocation8 + $0xa0] sm:$0xff]
    %v154 = vld [vmem:[#allocation8 + $0xa8] sm:$0xff]
    %v155 = vld [vmem:[#allocation8 + $0xb0] sm:$0xff]
    %v156 = vld [vmem:[#allocation8 + $0xb8] sm:$0xff]
    %v157 = vld [vmem:[#allocation8 + $0xc0] sm:$0xff]
    %v158 = vld [vmem:[#allocation8 + $0xc8] sm:$0xff]
    %v159 = vld [vmem:[#allocation8 + $0xd0] sm:$0xff]
    %v160 = vld [vmem:[#allocation8 + $0xd8] sm:$0xff]
    %v161 = vld [vmem:[#allocation8 + $0xe0] sm:$0xff]
    %v162 = vld [vmem:[#allocation8 + $0xe8] sm:$0xff]
    %v163 = vld [vmem:[#allocation8 + $0xf0] sm:$0xff]
    %v164 = vld [vmem:[#allocation8 + $0xf8] sm:$0xff]
    %v165 = vld [vmem:[#allocation8 + $0x100] sm:$0xff]
    %v166 = vld [vmem:[#allocation8 + $0x108] sm:$0xff]
    %v167 = vld [vmem:[#allocation8 + $0x110] sm:$0xff]
    %v168 = vld [vmem:[#allocation8 + $0x118] sm:$0xff]
    %v169 = vld [vmem:[#allocation8 + $0x120] sm:$0xff]
    %v170 = vld [vmem:[#allocation8 + $0x128] sm:$0xff]
    %v171 = vld [vmem:[#allocation8 + $0x130] sm:$0xff]
    %v172 = vld [vmem:[#allocation8 + $0x138] sm:$0xff]
    %v173 = vld [vmem:[#allocation8 + $0x140] sm:$0xff]
    %v174 = vld [vmem:[#allocation8 + $0x148] sm:$0xff]
    %v175 = vld [vmem:[#allocation8 + $0x150] sm:$0xff]
    %v176 = vld [vmem:[#allocation8 + $0x158] sm:$0xff]
    %v177 = vld [vmem:[#allocation8 + $0x160] sm:$0xff]
    %v178 = vld [vmem:[#allocation8 + $0x168] sm:$0xff]
    %v179 = vld [vmem:[#allocation8 + $0x170] sm:$0xff]
    %v180 = vld [vmem:[#allocation8 + $0x178] sm:$0xff]
    %v181 = vld [vmem:[#allocation8 + $0x180] sm:$0xff]
    %v182 = vld [vmem:[#allocation8 + $0x188] sm:$0xff]
    %v183 = vld [vmem:[#allocation8 + $0x190] sm:$0xff]
    %v184 = vld [vmem:[#allocation8 + $0x198] sm:$0xff]
    %v185 = vld [vmem:[#allocation8 + $0x1a0] sm:$0xff]
    %v186 = vld [vmem:[#allocation8 + $0x1a8] sm:$0xff]
    %v187 = vld [vmem:[#allocation8 + $0x1b0] sm:$0xff]
    %v188 = vld [vmem:[#allocation8 + $0x1b8] sm:$0xff]
    %v189 = vld [vmem:[#allocation8 + $0x1c0] sm:$0xff]
    %v190 = vld [vmem:[#allocation8 + $0x1c8] sm:$0xff]
    %v191 = vld [vmem:[#allocation8 + $0x1d0] sm:$0xff]
    %v192 = vld [vmem:[#allocation8 + $0x1d8] sm:$0xff]
    %v193 = vld [vmem:[#allocation8 + $0x1e0] sm:$0xff]
    %v194 = vld [vmem:[#allocation8 + $0x1e8] sm:$0xff]
    %v195 = vld [vmem:[#allocation8 + $0x1f0] sm:$0xff]
    %v196 = vld [vmem:[#allocation8 + $0x1f8] sm:$0xff]
    %v197 = vld [vmem:[#allocation2] sm:$0xff]
    %v198 = vld [vmem:[#allocation5] sm:$0xff]
    %v200 = vlaneseq
    %v201 = vshrl.u32 %v200, 7
    %v202 = vsub.s32 0, %v201
    %v203 = vrot.slane %v197, %v202
    %v204 = vlaneseq
    %v205 = vshrl.u32 %v204, 7
    %v206 = vsub.s32 4, %v205
    %v207 = vrot.slane %v197, %v206
    %v210 = vlaneseq
    %v211 = vshrl.u32 %v210, 7
    %v212 = vsub.s32 0, %v211
    %v213 = vrot.slane %v203, %v212
    %v214 = vlaneseq
    %v215 = vshrl.u32 %v214, 7
    %v216 = vsub.s32 0, %v215
    %v217 = vrot.slane %v207, %v216
    %v218 = vmul.f32 %v69, %v213
    %v219 = vmul.f32 %v70, %v217
    %v220 = vmul.f32 %v71, %v213
    %v221 = vmul.f32 %v72, %v217
    %v222 = vmul.f32 %v73, %v213
    %v223 = vmul.f32 %v74, %v217
    %v224 = vmul.f32 %v75, %v213
    %v225 = vmul.f32 %v76, %v217
    %v226 = vmul.f32 %v77, %v213
    %v227 = vmul.f32 %v78, %v217
    %v228 = vmul.f32 %v79, %v213
    %v229 = vmul.f32 %v80, %v217
    %v230 = vmul.f32 %v81, %v213
    %v231 = vmul.f32 %v82, %v217
    %v232 = vmul.f32 %v83, %v213
    %v233 = vmul.f32 %v84, %v217
    %v234 = vmul.f32 %v85, %v213
    %v235 = vmul.f32 %v86, %v217
    %v236 = vmul.f32 %v87, %v213
    %v237 = vmul.f32 %v88, %v217
    %v238 = vmul.f32 %v89, %v213
    %v239 = vmul.f32 %v90, %v217
    %v240 = vmul.f32 %v91, %v213
    %v241 = vmul.f32 %v92, %v217
    %v242 = vmul.f32 %v93, %v213
    %v243 = vmul.f32 %v94, %v217
    %v244 = vmul.f32 %v95, %v213
    %v245 = vmul.f32 %v96, %v217
    %v246 = vmul.f32 %v97, %v213
    %v247 = vmul.f32 %v98, %v217
    %v248 = vmul.f32 %v99, %v213
    %v249 = vmul.f32 %v100, %v217
    %v250 = vmul.f32 %v101, %v213
    %v251 = vmul.f32 %v102, %v217
    %v252 = vmul.f32 %v103, %v213
    %v253 = vmul.f32 %v104, %v217
    %v254 = vmul.f32 %v105, %v213
    %v255 = vmul.f32 %v106, %v217
    %v256 = vmul.f32 %v107, %v213
    %v257 = vmul.f32 %v108, %v217
    %v258 = vmul.f32 %v109, %v213
    %v259 = vmul.f32 %v110, %v217
    %v260 = vmul.f32 %v111, %v213
    %v261 = vmul.f32 %v112, %v217
    %v262 = vmul.f32 %v113, %v213
    %v263 = vmul.f32 %v114, %v217
    %v264 = vmul.f32 %v115, %v213
    %v265 = vmul.f32 %v116, %v217
    %v266 = vmul.f32 %v117, %v213
    %v267 = vmul.f32 %v118, %v217
    %v268 = vmul.f32 %v119, %v213
    %v269 = vmul.f32 %v120, %v217
    %v270 = vmul.f32 %v121, %v213
    %v271 = vmul.f32 %v122, %v217
    %v272 = vmul.f32 %v123, %v213
    %v273 = vmul.f32 %v124, %v217
    %v274 = vmul.f32 %v125, %v213
    %v275 = vmul.f32 %v126, %v217
    %v276 = vmul.f32 %v127, %v213
    %v277 = vmul.f32 %v128, %v217
    %v278 = vmul.f32 %v129, %v213
    %v279 = vmul.f32 %v130, %v217
    %v280 = vmul.f32 %v131, %v213
    %v281 = vmul.f32 %v132, %v217
    %v282 = vadd.f32 %v218, 1.0
    %v283 = vadd.f32 %v219, 1.0
    %v284 = vadd.f32 %v220, 1.0
    %v285 = vadd.f32 %v221, 1.0
    %v286 = vadd.f32 %v222, 1.0
    %v287 = vadd.f32 %v223, 1.0
    %v288 = vadd.f32 %v224, 1.0
    %v289 = vadd.f32 %v225, 1.0
    %v290 = vadd.f32 %v226, 1.0
    %v291 = vadd.f32 %v227, 1.0
    %v292 = vadd.f32 %v228, 1.0
    %v293 = vadd.f32 %v229, 1.0
    %v294 = vadd.f32 %v230, 1.0
    %v295 = vadd.f32 %v231, 1.0
    %v296 = vadd.f32 %v232, 1.0
    %v297 = vadd.f32 %v233, 1.0
    %v298 = vadd.f32 %v234, 1.0
    %v299 = vadd.f32 %v235, 1.0
    %v300 = vadd.f32 %v236, 1.0
    %v301 = vadd.f32 %v237, 1.0
    %v302 = vadd.f32 %v238, 1.0
    %v303 = vadd.f32 %v239, 1.0
    %v304 = vadd.f32 %v240, 1.0
    %v305 = vadd.f32 %v241, 1.0
    %v306 = vadd.f32 %v242, 1.0
    %v307 = vadd.f32 %v243, 1.0
    %v308 = vadd.f32 %v244, 1.0
    %v309 = vadd.f32 %v245, 1.0
    %v310 = vadd.f32 %v246, 1.0
    %v311 = vadd.f32 %v247, 1.0
    %v312 = vadd.f32 %v248, 1.0
    %v313 = vadd.f32 %v249, 1.0
    %v314 = vadd.f32 %v250, 1.0
    %v315 = vadd.f32 %v251, 1.0
    %v316 = vadd.f32 %v252, 1.0
    %v317 = vadd.f32 %v253, 1.0
    %v318 = vadd.f32 %v254, 1.0
    %v319 = vadd.f32 %v255, 1.0
    %v320 = vadd.f32 %v256, 1.0
    %v321 = vadd.f32 %v257, 1.0
    %v322 = vadd.f32 %v258, 1.0
    %v323 = vadd.f32 %v259, 1.0
    %v324 = vadd.f32 %v260, 1.0
    %v325 = vadd.f32 %v261, 1.0
    %v326 = vadd.f32 %v262, 1.0
    %v327 = vadd.f32 %v263, 1.0
    %v328 = vadd.f32 %v264, 1.0
    %v329 = vadd.f32 %v265, 1.0
    %v330 = vadd.f32 %v266, 1.0
    %v331 = vadd.f32 %v267, 1.0
    %v332 = vadd.f32 %v268, 1.0
    %v333 = vadd.f32 %v269, 1.0
    %v334 = vadd.f32 %v270, 1.0
    %v335 = vadd.f32 %v271, 1.0
    %v336 = vadd.f32 %v272, 1.0
    %v337 = vadd.f32 %v273, 1.0
    %v338 = vadd.f32 %v274, 1.0
    %v339 = vadd.f32 %v275, 1.0
    %v340 = vadd.f32 %v276, 1.0
    %v341 = vadd.f32 %v277, 1.0
    %v342 = vadd.f32 %v278, 1.0
    %v343 = vadd.f32 %v279, 1.0
    %v344 = vadd.f32 %v280, 1.0
    %v345 = vadd.f32 %v281, 1.0
    %v347 = vlaneseq
    %v348 = vshrl.u32 %v347, 7
    %v349 = vsub.s32 0, %v348
    %v350 = vrot.slane %v198, %v349
    %v351 = vlaneseq
    %v352 = vshrl.u32 %v351, 7
    %v353 = vsub.s32 4, %v352
    %v354 = vrot.slane %v198, %v353
    %v357 = vlaneseq
    %v358 = vshrl.u32 %v357, 7
    %v359 = vsub.s32 0, %v358
    %v360 = vrot.slane %v350, %v359
    %v361 = vlaneseq
    %v362 = vshrl.u32 %v361, 7
    %v363 = vsub.s32 0, %v362
    %v364 = vrot.slane %v354, %v363
    %v365 = vmul.f32 %v133, %v360
    %v366 = vmul.f32 %v134, %v364
    %v367 = vmul.f32 %v135, %v360
    %v368 = vmul.f32 %v136, %v364
    %v369 = vmul.f32 %v137, %v360
    %v370 = vmul.f32 %v138, %v364
    %v371 = vmul.f32 %v139, %v360
    %v372 = vmul.f32 %v140, %v364
    %v373 = vmul.f32 %v141, %v360
    %v374 = vmul.f32 %v142, %v364
    %v375 = vmul.f32 %v143, %v360
    %v376 = vmul.f32 %v144, %v364
    %v377 = vmul.f32 %v145, %v360
    %v378 = vmul.f32 %v146, %v364
    %v379 = vmul.f32 %v147, %v360
    %v380 = vmul.f32 %v148, %v364
    %v381 = vmul.f32 %v149, %v360
    %v382 = vmul.f32 %v150, %v364
    %v383 = vmul.f32 %v151, %v360
    %v384 = vmul.f32 %v152, %v364
    %v385 = vmul.f32 %v153, %v360
    %v386 = vmul.f32 %v154, %v364
    %v387 = vmul.f32 %v155, %v360
    %v388 = vmul.f32 %v156, %v364
    %v389 = vmul.f32 %v157, %v360
    %v390 = vmul.f32 %v158, %v364
    %v391 = vmul.f32 %v159, %v360
    %v392 = vmul.f32 %v160, %v364
    %v393 = vmul.f32 %v161, %v360
    %v394 = vmul.f32 %v162, %v364
    %v395 = vmul.f32 %v163, %v360
    %v396 = vmul.f32 %v164, %v364
    %v397 = vmul.f32 %v165, %v360
    %v398 = vmul.f32 %v166, %v364
    %v399 = vmul.f32 %v167, %v360
    %v400 = vmul.f32 %v168, %v364
    %v401 = vmul.f32 %v169, %v360
    %v402 = vmul.f32 %v170, %v364
    %v403 = vmul.f32 %v171, %v360
    %v404 = vmul.f32 %v172, %v364
    %v405 = vmul.f32 %v173, %v360
    %v406 = vmul.f32 %v174, %v364
    %v407 = vmul.f32 %v175, %v360
    %v408 = vmul.f32 %v176, %v364
    %v409 = vmul.f32 %v177, %v360
    %v410 = vmul.f32 %v178, %v364
    %v411 = vmul.f32 %v179, %v360
    %v412 = vmul.f32 %v180, %v364
    %v413 = vmul.f32 %v181, %v360
    %v414 = vmul.f32 %v182, %v364
    %v415 = vmul.f32 %v183, %v360
    %v416 = vmul.f32 %v184, %v364
    %v417 = vmul.f32 %v185, %v360
    %v418 = vmul.f32 %v186, %v364
    %v419 = vmul.f32 %v187, %v360
    %v420 = vmul.f32 %v188, %v364
    %v421 = vmul.f32 %v189, %v360
    %v422 = vmul.f32 %v190, %v364
    %v423 = vmul.f32 %v191, %v360
    %v424 = vmul.f32 %v192, %v364
    %v425 = vmul.f32 %v193, %v360
    %v426 = vmul.f32 %v194, %v364
    %v427 = vmul.f32 %v195, %v360
    %v428 = vmul.f32 %v196, %v364
    %v429 = vadd.f32 %v282, %v365
    %v430 = vadd.f32 %v283, %v366
    %v431 = vadd.f32 %v284, %v367
    %v432 = vadd.f32 %v285, %v368
    %v433 = vadd.f32 %v286, %v369
    %v434 = vadd.f32 %v287, %v370
    %v435 = vadd.f32 %v288, %v371
    %v436 = vadd.f32 %v289, %v372
    %v437 = vadd.f32 %v290, %v373
    %v438 = vadd.f32 %v291, %v374
    %v439 = vadd.f32 %v292, %v375
    %v440 = vadd.f32 %v293, %v376
    %v441 = vadd.f32 %v294, %v377
    %v442 = vadd.f32 %v295, %v378
    %v443 = vadd.f32 %v296, %v379
    %v444 = vadd.f32 %v297, %v380
    %v445 = vadd.f32 %v298, %v381
    %v446 = vadd.f32 %v299, %v382
    %v447 = vadd.f32 %v300, %v383
    %v448 = vadd.f32 %v301, %v384
    %v449 = vadd.f32 %v302, %v385
    %v450 = vadd.f32 %v303, %v386
    %v451 = vadd.f32 %v304, %v387
    %v452 = vadd.f32 %v305, %v388
    %v453 = vadd.f32 %v306, %v389
    %v454 = vadd.f32 %v307, %v390
    %v455 = vadd.f32 %v308, %v391
    %v456 = vadd.f32 %v309, %v392
    %v457 = vadd.f32 %v310, %v393
    %v458 = vadd.f32 %v311, %v394
    %v459 = vadd.f32 %v312, %v395
    %v460 = vadd.f32 %v313, %v396
    %v461 = vadd.f32 %v314, %v397
    %v462 = vadd.f32 %v315, %v398
    %v463 = vadd.f32 %v316, %v399
    %v464 = vadd.f32 %v317, %v400
    %v465 = vadd.f32 %v318, %v401
    %v466 = vadd.f32 %v319, %v402
    %v467 = vadd.f32 %v320, %v403
    %v468 = vadd.f32 %v321, %v404
    %v469 = vadd.f32 %v322, %v405
    %v470 = vadd.f32 %v323, %v406
    %v471 = vadd.f32 %v324, %v407
    %v472 = vadd.f32 %v325, %v408
    %v473 = vadd.f32 %v326, %v409
    %v474 = vadd.f32 %v327, %v410
    %v475 = vadd.f32 %v328, %v411
    %v476 = vadd.f32 %v329, %v412
    %v477 = vadd.f32 %v330, %v413
    %v478 = vadd.f32 %v331, %v414
    %v479 = vadd.f32 %v332, %v415
    %v480 = vadd.f32 %v333, %v416
    %v481 = vadd.f32 %v334, %v417
    %v482 = vadd.f32 %v335, %v418
    %v483 = vadd.f32 %v336, %v419
    %v484 = vadd.f32 %v337, %v420
    %v485 = vadd.f32 %v338, %v421
    %v486 = vadd.f32 %v339, %v422
    %v487 = vadd.f32 %v340, %v423
    %v488 = vadd.f32 %v341, %v424
    %v489 = vadd.f32 %v342, %v425
    %v490 = vadd.f32 %v343, %v426
    %v491 = vadd.f32 %v344, %v427
    %v492 = vadd.f32 %v345, %v428
    %v493 = vlaneseq
    %v494 = vshrl.u32 %v493, 7
    %v495 = vsub.s32 1, %v494
    %v496 = vrot.slane %v197, %v495
    %v497 = vlaneseq
    %v498 = vshrl.u32 %v497, 7
    %v499 = vsub.s32 5, %v498
    %v500 = vrot.slane %v197, %v499
    %v503 = vlaneseq
    %v504 = vshrl.u32 %v503, 7
    %v505 = vsub.s32 1, %v504
    %v506 = vrot.slane %v496, %v505
    %v507 = vlaneseq
    %v508 = vshrl.u32 %v507, 7
    %v509 = vsub.s32 1, %v508
    %v510 = vrot.slane %v500, %v509
    %v511 = vmul.f32 %v69, %v506
    %v512 = vmul.f32 %v70, %v510
    %v513 = vmul.f32 %v71, %v506
    %v514 = vmul.f32 %v72, %v510
    %v515 = vmul.f32 %v73, %v506
    %v516 = vmul.f32 %v74, %v510
    %v517 = vmul.f32 %v75, %v506
    %v518 = vmul.f32 %v76, %v510
    %v519 = vmul.f32 %v77, %v506
    %v520 = vmul.f32 %v78, %v510
    %v521 = vmul.f32 %v79, %v506
    %v522 = vmul.f32 %v80, %v510
    %v523 = vmul.f32 %v81, %v506
    %v524 = vmul.f32 %v82, %v510
    %v525 = vmul.f32 %v83, %v506
    %v526 = vmul.f32 %v84, %v510
    %v527 = vmul.f32 %v85, %v506
    %v528 = vmul.f32 %v86, %v510
    %v529 = vmul.f32 %v87, %v506
    %v530 = vmul.f32 %v88, %v510
    %v531 = vmul.f32 %v89, %v506
    %v532 = vmul.f32 %v90, %v510
    %v533 = vmul.f32 %v91, %v506
    %v534 = vmul.f32 %v92, %v510
    %v535 = vmul.f32 %v93, %v506
    %v536 = vmul.f32 %v94, %v510
    %v537 = vmul.f32 %v95, %v506
    %v538 = vmul.f32 %v96, %v510
    %v539 = vmul.f32 %v97, %v506
    %v540 = vmul.f32 %v98, %v510
    %v541 = vmul.f32 %v99, %v506
    %v542 = vmul.f32 %v100, %v510
    %v543 = vmul.f32 %v101, %v506
    %v544 = vmul.f32 %v102, %v510
    %v545 = vmul.f32 %v103, %v506
    %v546 = vmul.f32 %v104, %v510
    %v547 = vmul.f32 %v105, %v506
    %v548 = vmul.f32 %v106, %v510
    %v549 = vmul.f32 %v107, %v506
    %v550 = vmul.f32 %v108, %v510
    %v551 = vmul.f32 %v109, %v506
    %v552 = vmul.f32 %v110, %v510
    %v553 = vmul.f32 %v111, %v506
    %v554 = vmul.f32 %v112, %v510
    %v555 = vmul.f32 %v113, %v506
    %v556 = vmul.f32 %v114, %v510
    %v557 = vmul.f32 %v115, %v506
    %v558 = vmul.f32 %v116, %v510
    %v559 = vmul.f32 %v117, %v506
    %v560 = vmul.f32 %v118, %v510
    %v561 = vmul.f32 %v119, %v506
    %v562 = vmul.f32 %v120, %v510
    %v563 = vmul.f32 %v121, %v506
    %v564 = vmul.f32 %v122, %v510
    %v565 = vmul.f32 %v123, %v506
    %v566 = vmul.f32 %v124, %v510
    %v567 = vmul.f32 %v125, %v506
    %v568 = vmul.f32 %v126, %v510
    %v569 = vmul.f32 %v127, %v506
    %v570 = vmul.f32 %v128, %v510
    %v571 = vmul.f32 %v129, %v506
    %v572 = vmul.f32 %v130, %v510
    %v573 = vmul.f32 %v131, %v506
    %v574 = vmul.f32 %v132, %v510
    %v575 = vlaneseq
    %v576 = vshrl.u32 %v575, 7
    %v577 = vsub.s32 1, %v576
    %v578 = vrot.slane %v198, %v577
    %v579 = vlaneseq
    %v580 = vshrl.u32 %v579, 7
    %v581 = vsub.s32 5, %v580
    %v582 = vrot.slane %v198, %v581
    %v585 = vlaneseq
    %v586 = vshrl.u32 %v585, 7
    %v587 = vsub.s32 1, %v586
    %v588 = vrot.slane %v578, %v587
    %v589 = vlaneseq
    %v590 = vshrl.u32 %v589, 7
    %v591 = vsub.s32 1, %v590
    %v592 = vrot.slane %v582, %v591
    %v593 = vmul.f32 %v133, %v588
    %v594 = vmul.f32 %v134, %v592
    %v595 = vmul.f32 %v135, %v588
    %v596 = vmul.f32 %v136, %v592
    %v597 = vmul.f32 %v137, %v588
    %v598 = vmul.f32 %v138, %v592
    %v599 = vmul.f32 %v139, %v588
    %v600 = vmul.f32 %v140, %v592
    %v601 = vmul.f32 %v141, %v588
    %v602 = vmul.f32 %v142, %v592
    %v603 = vmul.f32 %v143, %v588
    %v604 = vmul.f32 %v144, %v592
    %v605 = vmul.f32 %v145, %v588
    %v606 = vmul.f32 %v146, %v592
    %v607 = vmul.f32 %v147, %v588
    %v608 = vmul.f32 %v148, %v592
    %v609 = vmul.f32 %v149, %v588
    %v610 = vmul.f32 %v150, %v592
    %v611 = vmul.f32 %v151, %v588
    %v612 = vmul.f32 %v152, %v592
    %v613 = vmul.f32 %v153, %v588
    %v614 = vmul.f32 %v154, %v592
    %v615 = vmul.f32 %v155, %v588
    %v616 = vmul.f32 %v156, %v592
    %v617 = vmul.f32 %v157, %v588
    %v618 = vmul.f32 %v158, %v592
    %v619 = vmul.f32 %v159, %v588
    %v620 = vmul.f32 %v160, %v592
    %v621 = vmul.f32 %v161, %v588
    %v622 = vmul.f32 %v162, %v592
    %v623 = vmul.f32 %v163, %v588
    %v624 = vmul.f32 %v164, %v592
    %v625 = vmul.f32 %v165, %v588
    %v626 = vmul.f32 %v166, %v592
    %v627 = vmul.f32 %v167, %v588
    %v628 = vmul.f32 %v168, %v592
    %v629 = vmul.f32 %v169, %v588
    %v630 = vmul.f32 %v170, %v592
    %v631 = vmul.f32 %v171, %v588
    %v632 = vmul.f32 %v172, %v592
    %v633 = vmul.f32 %v173, %v588
    %v634 = vmul.f32 %v174, %v592
    %v635 = vmul.f32 %v175, %v588
    %v636 = vmul.f32 %v176, %v592
    %v637 = vmul.f32 %v177, %v588
    %v638 = vmul.f32 %v178, %v592
    %v639 = vmul.f32 %v179, %v588
    %v640 = vmul.f32 %v180, %v592
    %v641 = vmul.f32 %v181, %v588
    %v642 = vmul.f32 %v182, %v592
    %v643 = vmul.f32 %v183, %v588
    %v644 = vmul.f32 %v184, %v592
    %v645 = vmul.f32 %v185, %v588
    %v646 = vmul.f32 %v186, %v592
    %v647 = vmul.f32 %v187, %v588
    %v648 = vmul.f32 %v188, %v592
    %v649 = vmul.f32 %v189, %v588
    %v650 = vmul.f32 %v190, %v592
    %v651 = vmul.f32 %v191, %v588
    %v652 = vmul.f32 %v192, %v592
    %v653 = vmul.f32 %v193, %v588
    %v654 = vmul.f32 %v194, %v592
    %v655 = vmul.f32 %v195, %v588
    %v656 = vmul.f32 %v196, %v592
    %v657 = vadd.f32 %v511, %v593
    %v658 = vadd.f32 %v512, %v594
    %v659 = vadd.f32 %v513, %v595
    %v660 = vadd.f32 %v514, %v596
    %v661 = vadd.f32 %v515, %v597
    %v662 = vadd.f32 %v516, %v598
    %v663 = vadd.f32 %v517, %v599
    %v664 = vadd.f32 %v518, %v600
    %v665 = vadd.f32 %v519, %v601
    %v666 = vadd.f32 %v520, %v602
    %v667 = vadd.f32 %v521, %v603
    %v668 = vadd.f32 %v522, %v604
    %v669 = vadd.f32 %v523, %v605
    %v670 = vadd.f32 %v524, %v606
    %v671 = vadd.f32 %v525, %v607
    %v672 = vadd.f32 %v526, %v608
    %v673 = vadd.f32 %v527, %v609
    %v674 = vadd.f32 %v528, %v610
    %v675 = vadd.f32 %v529, %v611
    %v676 = vadd.f32 %v530, %v612
    %v677 = vadd.f32 %v531, %v613
    %v678 = vadd.f32 %v532, %v614
    %v679 = vadd.f32 %v533, %v615
    %v680 = vadd.f32 %v534, %v616
    %v681 = vadd.f32 %v535, %v617
    %v682 = vadd.f32 %v536, %v618
    %v683 = vadd.f32 %v537, %v619
    %v684 = vadd.f32 %v538, %v620
    %v685 = vadd.f32 %v539, %v621
    %v686 = vadd.f32 %v540, %v622
    %v687 = vadd.f32 %v541, %v623
    %v688 = vadd.f32 %v542, %v624
    %v689 = vadd.f32 %v543, %v625
    %v690 = vadd.f32 %v544, %v626
    %v691 = vadd.f32 %v545, %v627
    %v692 = vadd.f32 %v546, %v628
    %v693 = vadd.f32 %v547, %v629
    %v694 = vadd.f32 %v548, %v630
    %v695 = vadd.f32 %v549, %v631
    %v696 = vadd.f32 %v550, %v632
    %v697 = vadd.f32 %v551, %v633
    %v698 = vadd.f32 %v552, %v634
    %v699 = vadd.f32 %v553, %v635
    %v700 = vadd.f32 %v554, %v636
    %v701 = vadd.f32 %v555, %v637
    %v702 = vadd.f32 %v556, %v638
    %v703 = vadd.f32 %v557, %v639
    %v704 = vadd.f32 %v558, %v640
    %v705 = vadd.f32 %v559, %v641
    %v706 = vadd.f32 %v560, %v642
    %v707 = vadd.f32 %v561, %v643
    %v708 = vadd.f32 %v562, %v644
    %v709 = vadd.f32 %v563, %v645
    %v710 = vadd.f32 %v564, %v646
    %v711 = vadd.f32 %v565, %v647
    %v712 = vadd.f32 %v566, %v648
    %v713 = vadd.f32 %v567, %v649
    %v714 = vadd.f32 %v568, %v650
    %v715 = vadd.f32 %v569, %v651
    %v716 = vadd.f32 %v570, %v652
    %v717 = vadd.f32 %v571, %v653
    %v718 = vadd.f32 %v572, %v654
    %v719 = vadd.f32 %v573, %v655
    %v720 = vadd.f32 %v574, %v656
    %721 = vrot.lane.b32.xlu0 %v657, 1
    %v722 = vpop.permute.xlu0 %721
    %723 = vrot.lane.b32.xlu0 %v659, 1
    %v724 = vpop.permute.xlu0 %723
    %725 = vrot.lane.b32.xlu0 %v661, 1
    %v726 = vpop.permute.xlu0 %725
    %727 = vrot.lane.b32.xlu0 %v663, 1
    %v728 = vpop.permute.xlu0 %727
    %729 = vrot.lane.b32.xlu0 %v665, 1
    %v730 = vpop.permute.xlu0 %729
    %731 = vrot.lane.b32.xlu0 %v667, 1
    %v732 = vpop.permute.xlu0 %731
    %733 = vrot.lane.b32.xlu0 %v669, 1
    %v734 = vpop.permute.xlu0 %733
    %735 = vrot.lane.b32.xlu0 %v671, 1
    %v736 = vpop.permute.xlu0 %735
    %737 = vrot.lane.b32.xlu0 %v673, 1
    %v738 = vpop.permute.xlu0 %737
    %739 = vrot.lane.b32.xlu0 %v675, 1
    %v740 = vpop.permute.xlu0 %739
    %741 = vrot.lane.b32.xlu0 %v677, 1
    %v742 = vpop.permute.xlu0 %741
    %743 = vrot.lane.b32.xlu0 %v679, 1
    %v744 = vpop.permute.xlu0 %743
    %745 = vrot.lane.b32.xlu0 %v681, 1
    %v746 = vpop.permute.xlu0 %745
    %747 = vrot.lane.b32.xlu0 %v683, 1
    %v748 = vpop.permute.xlu0 %747
    %749 = vrot.lane.b32.xlu0 %v685, 1
    %v750 = vpop.permute.xlu0 %749
    %751 = vrot.lane.b32.xlu0 %v687, 1
    %v752 = vpop.permute.xlu0 %751
    %753 = vrot.lane.b32.xlu0 %v689, 1
    %v754 = vpop.permute.xlu0 %753
    %755 = vrot.lane.b32.xlu0 %v691, 1
    %v756 = vpop.permute.xlu0 %755
    %757 = vrot.lane.b32.xlu0 %v693, 1
    %v758 = vpop.permute.xlu0 %757
    %759 = vrot.lane.b32.xlu0 %v695, 1
    %v760 = vpop.permute.xlu0 %759
    %761 = vrot.lane.b32.xlu0 %v697, 1
    %v762 = vpop.permute.xlu0 %761
    %763 = vrot.lane.b32.xlu0 %v699, 1
    %v764 = vpop.permute.xlu0 %763
    %765 = vrot.lane.b32.xlu0 %v701, 1
    %v766 = vpop.permute.xlu0 %765
    %767 = vrot.lane.b32.xlu0 %v703, 1
    %v768 = vpop.permute.xlu0 %767
    %769 = vrot.lane.b32.xlu0 %v705, 1
    %v770 = vpop.permute.xlu0 %769
    %771 = vrot.lane.b32.xlu0 %v707, 1
    %v772 = vpop.permute.xlu0 %771
    %773 = vrot.lane.b32.xlu0 %v709, 1
    %v774 = vpop.permute.xlu0 %773
    %775 = vrot.lane.b32.xlu0 %v711, 1
    %v776 = vpop.permute.xlu0 %775
    %777 = vrot.lane.b32.xlu0 %v713, 1
    %v778 = vpop.permute.xlu0 %777
    %779 = vrot.lane.b32.xlu0 %v715, 1
    %v780 = vpop.permute.xlu0 %779
    %781 = vrot.lane.b32.xlu0 %v717, 1
    %v782 = vpop.permute.xlu0 %781
    %783 = vrot.lane.b32.xlu0 %v719, 1
    %v784 = vpop.permute.xlu0 %783
    %785 = vrot.lane.b32.xlu0 %v658, 1
    %v786 = vpop.permute.xlu0 %785
    %787 = vrot.lane.b32.xlu0 %v660, 1
    %v788 = vpop.permute.xlu0 %787
    %789 = vrot.lane.b32.xlu0 %v662, 1
    %v790 = vpop.permute.xlu0 %789
    %791 = vrot.lane.b32.xlu0 %v664, 1
    %v792 = vpop.permute.xlu0 %791
    %793 = vrot.lane.b32.xlu0 %v666, 1
    %v794 = vpop.permute.xlu0 %793
    %795 = vrot.lane.b32.xlu0 %v668, 1
    %v796 = vpop.permute.xlu0 %795
    %797 = vrot.lane.b32.xlu0 %v670, 1
    %v798 = vpop.permute.xlu0 %797
    %799 = vrot.lane.b32.xlu0 %v672, 1
    %v800 = vpop.permute.xlu0 %799
    %801 = vrot.lane.b32.xlu0 %v674, 1
    %v802 = vpop.permute.xlu0 %801
    %803 = vrot.lane.b32.xlu0 %v676, 1
    %v804 = vpop.permute.xlu0 %803
    %805 = vrot.lane.b32.xlu0 %v678, 1
    %v806 = vpop.permute.xlu0 %805
    %807 = vrot.lane.b32.xlu0 %v680, 1
    %v808 = vpop.permute.xlu0 %807
    %809 = vrot.lane.b32.xlu0 %v682, 1
    %v810 = vpop.permute.xlu0 %809
    %811 = vrot.lane.b32.xlu0 %v684, 1
    %v812 = vpop.permute.xlu0 %811
    %813 = vrot.lane.b32.xlu0 %v686, 1
    %v814 = vpop.permute.xlu0 %813
    %815 = vrot.lane.b32.xlu0 %v688, 1
    %v816 = vpop.permute.xlu0 %815
    %817 = vrot.lane.b32.xlu0 %v690, 1
    %v818 = vpop.permute.xlu0 %817
    %819 = vrot.lane.b32.xlu0 %v692, 1
    %v820 = vpop.permute.xlu0 %819
    %821 = vrot.lane.b32.xlu0 %v694, 1
    %v822 = vpop.permute.xlu0 %821
    %823 = vrot.lane.b32.xlu0 %v696, 1
    %v824 = vpop.permute.xlu0 %823
    %825 = vrot.lane.b32.xlu0 %v698, 1
    %v826 = vpop.permute.xlu0 %825
    %827 = vrot.lane.b32.xlu0 %v700, 1
    %v828 = vpop.permute.xlu0 %827
    %829 = vrot.lane.b32.xlu0 %v702, 1
    %v830 = vpop.permute.xlu0 %829
    %831 = vrot.lane.b32.xlu0 %v704, 1
    %v832 = vpop.permute.xlu0 %831
    %833 = vrot.lane.b32.xlu0 %v706, 1
    %v834 = vpop.permute.xlu0 %833
    %835 = vrot.lane.b32.xlu0 %v708, 1
    %v836 = vpop.permute.xlu0 %835
    %837 = vrot.lane.b32.xlu0 %v710, 1
    %v838 = vpop.permute.xlu0 %837
    %839 = vrot.lane.b32.xlu0 %v712, 1
    %v840 = vpop.permute.xlu0 %839
    %841 = vrot.lane.b32.xlu0 %v714, 1
    %v842 = vpop.permute.xlu0 %841
    %843 = vrot.lane.b32.xlu0 %v716, 1
    %v844 = vpop.permute.xlu0 %843
    %845 = vrot.lane.b32.xlu0 %v718, 1
    %v846 = vpop.permute.xlu0 %845
    %847 = vrot.lane.b32.xlu0 %v720, 1
    %v848 = vpop.permute.xlu0 %847
    %v849 = vlaneseq
    %v850 = vand.u32 %v849, 127
    %vm851 = vcmp.lt.s32.totalorder %v850, 1
    %v852 = vsel %vm851, %v722, %v786
    %v853 = vsel %vm851, %v724, %v788
    %v854 = vsel %vm851, %v726, %v790
    %v855 = vsel %vm851, %v728, %v792
    %v856 = vsel %vm851, %v730, %v794
    %v857 = vsel %vm851, %v732, %v796
    %v858 = vsel %vm851, %v734, %v798
    %v859 = vsel %vm851, %v736, %v800
    %v860 = vsel %vm851, %v738, %v802
    %v861 = vsel %vm851, %v740, %v804
    %v862 = vsel %vm851, %v742, %v806
    %v863 = vsel %vm851, %v744, %v808
    %v864 = vsel %vm851, %v746, %v810
    %v865 = vsel %vm851, %v748, %v812
    %v866 = vsel %vm851, %v750, %v814
    %v867 = vsel %vm851, %v752, %v816
    %v868 = vsel %vm851, %v754, %v818
    %v869 = vsel %vm851, %v756, %v820
    %v870 = vsel %vm851, %v758, %v822
    %v871 = vsel %vm851, %v760, %v824
    %v872 = vsel %vm851, %v762, %v826
    %v873 = vsel %vm851, %v764, %v828
    %v874 = vsel %vm851, %v766, %v830
    %v875 = vsel %vm851, %v768, %v832
    %v876 = vsel %vm851, %v770, %v834
    %v877 = vsel %vm851, %v772, %v836
    %v878 = vsel %vm851, %v774, %v838
    %v879 = vsel %vm851, %v776, %v840
    %v880 = vsel %vm851, %v778, %v842
    %v881 = vsel %vm851, %v780, %v844
    %v882 = vsel %vm851, %v782, %v846
    %v883 = vsel %vm851, %v784, %v848
    %v884 = vsel %vm851, %v786, %v722
    %v885 = vsel %vm851, %v788, %v724
    %v886 = vsel %vm851, %v790, %v726
    %v887 = vsel %vm851, %v792, %v728
    %v888 = vsel %vm851, %v794, %v730
    %v889 = vsel %vm851, %v796, %v732
    %v890 = vsel %vm851, %v798, %v734
    %v891 = vsel %vm851, %v800, %v736
    %v892 = vsel %vm851, %v802, %v738
    %v893 = vsel %vm851, %v804, %v740
    %v894 = vsel %vm851, %v806, %v742
    %v895 = vsel %vm851, %v808, %v744
    %v896 = vsel %vm851, %v810, %v746
    %v897 = vsel %vm851, %v812, %v748
    %v898 = vsel %vm851, %v814, %v750
    %v899 = vsel %vm851, %v816, %v752
    %v900 = vsel %vm851, %v818, %v754
    %v901 = vsel %vm851, %v820, %v756
    %v902 = vsel %vm851, %v822, %v758
    %v903 = vsel %vm851, %v824, %v760
    %v904 = vsel %vm851, %v826, %v762
    %v905 = vsel %vm851, %v828, %v764
    %v906 = vsel %vm851, %v830, %v766
    %v907 = vsel %vm851, %v832, %v768
    %v908 = vsel %vm851, %v834, %v770
    %v909 = vsel %vm851, %v836, %v772
    %v910 = vsel %vm851, %v838, %v774
    %v911 = vsel %vm851, %v840, %v776
    %v912 = vsel %vm851, %v842, %v778
    %v913 = vsel %vm851, %v844, %v780
    %v914 = vsel %vm851, %v846, %v782
    %v915 = vsel %vm851, %v848, %v784
    %v916 = vadd.f32 %v429, %v884
    %v917 = vadd.f32 %v430, %v852
    %v918 = vadd.f32 %v431, %v885
    %v919 = vadd.f32 %v432, %v853
    %v920 = vadd.f32 %v433, %v886
    %v921 = vadd.f32 %v434, %v854
    %v922 = vadd.f32 %v435, %v887
    %v923 = vadd.f32 %v436, %v855
    %v924 = vadd.f32 %v437, %v888
    %v925 = vadd.f32 %v438, %v856
    %v926 = vadd.f32 %v439, %v889
    %v927 = vadd.f32 %v440, %v857
    %v928 = vadd.f32 %v441, %v890
    %v929 = vadd.f32 %v442, %v858
    %v930 = vadd.f32 %v443, %v891
    %v931 = vadd.f32 %v444, %v859
    %v932 = vadd.f32 %v445, %v892
    %v933 = vadd.f32 %v446, %v860
    %v934 = vadd.f32 %v447, %v893
    %v935 = vadd.f32 %v448, %v861
    %v936 = vadd.f32 %v449, %v894
    %v937 = vadd.f32 %v450, %v862
    %v938 = vadd.f32 %v451, %v895
    %v939 = vadd.f32 %v452, %v863
    %v940 = vadd.f32 %v453, %v896
    %v941 = vadd.f32 %v454, %v864
    %v942 = vadd.f32 %v455, %v897
    %v943 = vadd.f32 %v456, %v865
    %v944 = vadd.f32 %v457, %v898
    %v945 = vadd.f32 %v458, %v866
    %v946 = vadd.f32 %v459, %v899
    %v947 = vadd.f32 %v460, %v867
    %v948 = vadd.f32 %v461, %v900
    %v949 = vadd.f32 %v462, %v868
    %v950 = vadd.f32 %v463, %v901
    %v951 = vadd.f32 %v464, %v869
    %v952 = vadd.f32 %v465, %v902
    %v953 = vadd.f32 %v466, %v870
    %v954 = vadd.f32 %v467, %v903
    %v955 = vadd.f32 %v468, %v871
    %v956 = vadd.f32 %v469, %v904
    %v957 = vadd.f32 %v470, %v872
    %v958 = vadd.f32 %v471, %v905
    %v959 = vadd.f32 %v472, %v873
    %v960 = vadd.f32 %v473, %v906
    %v961 = vadd.f32 %v474, %v874
    %v962 = vadd.f32 %v475, %v907
    %v963 = vadd.f32 %v476, %v875
    %v964 = vadd.f32 %v477, %v908
    %v965 = vadd.f32 %v478, %v876
    %v966 = vadd.f32 %v479, %v909
    %v967 = vadd.f32 %v480, %v877
    %v968 = vadd.f32 %v481, %v910
    %v969 = vadd.f32 %v482, %v878
    %v970 = vadd.f32 %v483, %v911
    %v971 = vadd.f32 %v484, %v879
    %v972 = vadd.f32 %v485, %v912
    %v973 = vadd.f32 %v486, %v880
    %v974 = vadd.f32 %v487, %v913
    %v975 = vadd.f32 %v488, %v881
    %v976 = vadd.f32 %v489, %v914
    %v977 = vadd.f32 %v490, %v882
    %v978 = vadd.f32 %v491, %v915
    %v979 = vadd.f32 %v492, %v883
    %v980 = vlaneseq
    %v981 = vshrl.u32 %v980, 7
    %v982 = vsub.s32 2, %v981
    %v983 = vrot.slane %v197, %v982
    %v984 = vlaneseq
    %v985 = vshrl.u32 %v984, 7
    %v986 = vsub.s32 6, %v985
    %v987 = vrot.slane %v197, %v986
    %v990 = vlaneseq
    %v991 = vshrl.u32 %v990, 7
    %v992 = vsub.s32 2, %v991
    %v993 = vrot.slane %v983, %v992
    %v994 = vlaneseq
    %v995 = vshrl.u32 %v994, 7
    %v996 = vsub.s32 2, %v995
    %v997 = vrot.slane %v987, %v996
    %v998 = vmul.f32 %v69, %v993
    %v999 = vmul.f32 %v70, %v997
    %v1000 = vmul.f32 %v71, %v993
    %v1001 = vmul.f32 %v72, %v997
    %v1002 = vmul.f32 %v73, %v993
    %v1003 = vmul.f32 %v74, %v997
    %v1004 = vmul.f32 %v75, %v993
    %v1005 = vmul.f32 %v76, %v997
    %v1006 = vmul.f32 %v77, %v993
    %v1007 = vmul.f32 %v78, %v997
    %v1008 = vmul.f32 %v79, %v993
    %v1009 = vmul.f32 %v80, %v997
    %v1010 = vmul.f32 %v81, %v993
    %v1011 = vmul.f32 %v82, %v997
    %v1012 = vmul.f32 %v83, %v993
    %v1013 = vmul.f32 %v84, %v997
    %v1014 = vmul.f32 %v85, %v993
    %v1015 = vmul.f32 %v86, %v997
    %v1016 = vmul.f32 %v87, %v993
    %v1017 = vmul.f32 %v88, %v997
    %v1018 = vmul.f32 %v89, %v993
    %v1019 = vmul.f32 %v90, %v997
    %v1020 = vmul.f32 %v91, %v993
    %v1021 = vmul.f32 %v92, %v997
    %v1022 = vmul.f32 %v93, %v993
    %v1023 = vmul.f32 %v94, %v997
    %v1024 = vmul.f32 %v95, %v993
    %v1025 = vmul.f32 %v96, %v997
    %v1026 = vmul.f32 %v97, %v993
    %v1027 = vmul.f32 %v98, %v997
    %v1028 = vmul.f32 %v99, %v993
    %v1029 = vmul.f32 %v100, %v997
    %v1030 = vmul.f32 %v101, %v993
    %v1031 = vmul.f32 %v102, %v997
    %v1032 = vmul.f32 %v103, %v993
    %v1033 = vmul.f32 %v104, %v997
    %v1034 = vmul.f32 %v105, %v993
    %v1035 = vmul.f32 %v106, %v997
    %v1036 = vmul.f32 %v107, %v993
    %v1037 = vmul.f32 %v108, %v997
    %v1038 = vmul.f32 %v109, %v993
    %v1039 = vmul.f32 %v110, %v997
    %v1040 = vmul.f32 %v111, %v993
    %v1041 = vmul.f32 %v112, %v997
    %v1042 = vmul.f32 %v113, %v993
    %v1043 = vmul.f32 %v114, %v997
    %v1044 = vmul.f32 %v115, %v993
    %v1045 = vmul.f32 %v116, %v997
    %v1046 = vmul.f32 %v117, %v993
    %v1047 = vmul.f32 %v118, %v997
    %v1048 = vmul.f32 %v119, %v993
    %v1049 = vmul.f32 %v120, %v997
    %v1050 = vmul.f32 %v121, %v993
    %v1051 = vmul.f32 %v122, %v997
    %v1052 = vmul.f32 %v123, %v993
    %v1053 = vmul.f32 %v124, %v997
    %v1054 = vmul.f32 %v125, %v993
    %v1055 = vmul.f32 %v126, %v997
    %v1056 = vmul.f32 %v127, %v993
    %v1057 = vmul.f32 %v128, %v997
    %v1058 = vmul.f32 %v129, %v993
    %v1059 = vmul.f32 %v130, %v997
    %v1060 = vmul.f32 %v131, %v993
    %v1061 = vmul.f32 %v132, %v997
    %v1062 = vlaneseq
    %v1063 = vshrl.u32 %v1062, 7
    %v1064 = vsub.s32 2, %v1063
    %v1065 = vrot.slane %v198, %v1064
    %v1066 = vlaneseq
    %v1067 = vshrl.u32 %v1066, 7
    %v1068 = vsub.s32 6, %v1067
    %v1069 = vrot.slane %v198, %v1068
    %v1072 = vlaneseq
    %v1073 = vshrl.u32 %v1072, 7
    %v1074 = vsub.s32 2, %v1073
    %v1075 = vrot.slane %v1065, %v1074
    %v1076 = vlaneseq
    %v1077 = vshrl.u32 %v1076, 7
    %v1078 = vsub.s32 2, %v1077
    %v1079 = vrot.slane %v1069, %v1078
    %v1080 = vmul.f32 %v133, %v1075
    %v1081 = vmul.f32 %v134, %v1079
    %v1082 = vmul.f32 %v135, %v1075
    %v1083 = vmul.f32 %v136, %v1079
    %v1084 = vmul.f32 %v137, %v1075
    %v1085 = vmul.f32 %v138, %v1079
    %v1086 = vmul.f32 %v139, %v1075
    %v1087 = vmul.f32 %v140, %v1079
    %v1088 = vmul.f32 %v141, %v1075
    %v1089 = vmul.f32 %v142, %v1079
    %v1090 = vmul.f32 %v143, %v1075
    %v1091 = vmul.f32 %v144, %v1079
    %v1092 = vmul.f32 %v145, %v1075
    %v1093 = vmul.f32 %v146, %v1079
    %v1094 = vmul.f32 %v147, %v1075
    %v1095 = vmul.f32 %v148, %v1079
    %v1096 = vmul.f32 %v149, %v1075
    %v1097 = vmul.f32 %v150, %v1079
    %v1098 = vmul.f32 %v151, %v1075
    %v1099 = vmul.f32 %v152, %v1079
    %v1100 = vmul.f32 %v153, %v1075
    %v1101 = vmul.f32 %v154, %v1079
    %v1102 = vmul.f32 %v155, %v1075
    %v1103 = vmul.f32 %v156, %v1079
    %v1104 = vmul.f32 %v157, %v1075
    %v1105 = vmul.f32 %v158, %v1079
    %v1106 = vmul.f32 %v159, %v1075
    %v1107 = vmul.f32 %v160, %v1079
    %v1108 = vmul.f32 %v161, %v1075
    %v1109 = vmul.f32 %v162, %v1079
    %v1110 = vmul.f32 %v163, %v1075
    %v1111 = vmul.f32 %v164, %v1079
    %v1112 = vmul.f32 %v165, %v1075
    %v1113 = vmul.f32 %v166, %v1079
    %v1114 = vmul.f32 %v167, %v1075
    %v1115 = vmul.f32 %v168, %v1079
    %v1116 = vmul.f32 %v169, %v1075
    %v1117 = vmul.f32 %v170, %v1079
    %v1118 = vmul.f32 %v171, %v1075
    %v1119 = vmul.f32 %v172, %v1079
    %v1120 = vmul.f32 %v173, %v1075
    %v1121 = vmul.f32 %v174, %v1079
    %v1122 = vmul.f32 %v175, %v1075
    %v1123 = vmul.f32 %v176, %v1079
    %v1124 = vmul.f32 %v177, %v1075
    %v1125 = vmul.f32 %v178, %v1079
    %v1126 = vmul.f32 %v179, %v1075
    %v1127 = vmul.f32 %v180, %v1079
    %v1128 = vmul.f32 %v181, %v1075
    %v1129 = vmul.f32 %v182, %v1079
    %v1130 = vmul.f32 %v183, %v1075
    %v1131 = vmul.f32 %v184, %v1079
    %v1132 = vmul.f32 %v185, %v1075
    %v1133 = vmul.f32 %v186, %v1079
    %v1134 = vmul.f32 %v187, %v1075
    %v1135 = vmul.f32 %v188, %v1079
    %v1136 = vmul.f32 %v189, %v1075
    %v1137 = vmul.f32 %v190, %v1079
    %v1138 = vmul.f32 %v191, %v1075
    %v1139 = vmul.f32 %v192, %v1079
    %v1140 = vmul.f32 %v193, %v1075
    %v1141 = vmul.f32 %v194, %v1079
    %v1142 = vmul.f32 %v195, %v1075
    %v1143 = vmul.f32 %v196, %v1079
    %v1144 = vadd.f32 %v998, %v1080
    %v1145 = vadd.f32 %v999, %v1081
    %v1146 = vadd.f32 %v1000, %v1082
    %v1147 = vadd.f32 %v1001, %v1083
    %v1148 = vadd.f32 %v1002, %v1084
    %v1149 = vadd.f32 %v1003, %v1085
    %v1150 = vadd.f32 %v1004, %v1086
    %v1151 = vadd.f32 %v1005, %v1087
    %v1152 = vadd.f32 %v1006, %v1088
    %v1153 = vadd.f32 %v1007, %v1089
    %v1154 = vadd.f32 %v1008, %v1090
    %v1155 = vadd.f32 %v1009, %v1091
    %v1156 = vadd.f32 %v1010, %v1092
    %v1157 = vadd.f32 %v1011, %v1093
    %v1158 = vadd.f32 %v1012, %v1094
    %v1159 = vadd.f32 %v1013, %v1095
    %v1160 = vadd.f32 %v1014, %v1096
    %v1161 = vadd.f32 %v1015, %v1097
    %v1162 = vadd.f32 %v1016, %v1098
    %v1163 = vadd.f32 %v1017, %v1099
    %v1164 = vadd.f32 %v1018, %v1100
    %v1165 = vadd.f32 %v1019, %v1101
    %v1166 = vadd.f32 %v1020, %v1102
    %v1167 = vadd.f32 %v1021, %v1103
    %v1168 = vadd.f32 %v1022, %v1104
    %v1169 = vadd.f32 %v1023, %v1105
    %v1170 = vadd.f32 %v1024, %v1106
    %v1171 = vadd.f32 %v1025, %v1107
    %v1172 = vadd.f32 %v1026, %v1108
    %v1173 = vadd.f32 %v1027, %v1109
    %v1174 = vadd.f32 %v1028, %v1110
    %v1175 = vadd.f32 %v1029, %v1111
    %v1176 = vadd.f32 %v1030, %v1112
    %v1177 = vadd.f32 %v1031, %v1113
    %v1178 = vadd.f32 %v1032, %v1114
    %v1179 = vadd.f32 %v1033, %v1115
    %v1180 = vadd.f32 %v1034, %v1116
    %v1181 = vadd.f32 %v1035, %v1117
    %v1182 = vadd.f32 %v1036, %v1118
    %v1183 = vadd.f32 %v1037, %v1119
    %v1184 = vadd.f32 %v1038, %v1120
    %v1185 = vadd.f32 %v1039, %v1121
    %v1186 = vadd.f32 %v1040, %v1122
    %v1187 = vadd.f32 %v1041, %v1123
    %v1188 = vadd.f32 %v1042, %v1124
    %v1189 = vadd.f32 %v1043, %v1125
    %v1190 = vadd.f32 %v1044, %v1126
    %v1191 = vadd.f32 %v1045, %v1127
    %v1192 = vadd.f32 %v1046, %v1128
    %v1193 = vadd.f32 %v1047, %v1129
    %v1194 = vadd.f32 %v1048, %v1130
    %v1195 = vadd.f32 %v1049, %v1131
    %v1196 = vadd.f32 %v1050, %v1132
    %v1197 = vadd.f32 %v1051, %v1133
    %v1198 = vadd.f32 %v1052, %v1134
    %v1199 = vadd.f32 %v1053, %v1135
    %v1200 = vadd.f32 %v1054, %v1136
    %v1201 = vadd.f32 %v1055, %v1137
    %v1202 = vadd.f32 %v1056, %v1138
    %v1203 = vadd.f32 %v1057, %v1139
    %v1204 = vadd.f32 %v1058, %v1140
    %v1205 = vadd.f32 %v1059, %v1141
    %v1206 = vadd.f32 %v1060, %v1142
    %v1207 = vadd.f32 %v1061, %v1143
    %1208 = vrot.lane.b32.xlu0 %v1144, 2
    %v1209 = vpop.permute.xlu0 %1208
    %1210 = vrot.lane.b32.xlu0 %v1146, 2
    %v1211 = vpop.permute.xlu0 %1210
    %1212 = vrot.lane.b32.xlu0 %v1148, 2
    %v1213 = vpop.permute.xlu0 %1212
    %1214 = vrot.lane.b32.xlu0 %v1150, 2
    %v1215 = vpop.permute.xlu0 %1214
    %1216 = vrot.lane.b32.xlu0 %v1152, 2
    %v1217 = vpop.permute.xlu0 %1216
    %1218 = vrot.lane.b32.xlu0 %v1154, 2
    %v1219 = vpop.permute.xlu0 %1218
    %1220 = vrot.lane.b32.xlu0 %v1156, 2
    %v1221 = vpop.permute.xlu0 %1220
    %1222 = vrot.lane.b32.xlu0 %v1158, 2
    %v1223 = vpop.permute.xlu0 %1222
    %1224 = vrot.lane.b32.xlu0 %v1160, 2
    %v1225 = vpop.permute.xlu0 %1224
    %1226 = vrot.lane.b32.xlu0 %v1162, 2
    %v1227 = vpop.permute.xlu0 %1226
    %1228 = vrot.lane.b32.xlu0 %v1164, 2
    %v1229 = vpop.permute.xlu0 %1228
    %1230 = vrot.lane.b32.xlu0 %v1166, 2
    %v1231 = vpop.permute.xlu0 %1230
    %1232 = vrot.lane.b32.xlu0 %v1168, 2
    %v1233 = vpop.permute.xlu0 %1232
    %1234 = vrot.lane.b32.xlu0 %v1170, 2
    %v1235 = vpop.permute.xlu0 %1234
    %1236 = vrot.lane.b32.xlu0 %v1172, 2
    %v1237 = vpop.permute.xlu0 %1236
    %1238 = vrot.lane.b32.xlu0 %v1174, 2
    %v1239 = vpop.permute.xlu0 %1238
    %1240 = vrot.lane.b32.xlu0 %v1176, 2
    %v1241 = vpop.permute.xlu0 %1240
    %1242 = vrot.lane.b32.xlu0 %v1178, 2
    %v1243 = vpop.permute.xlu0 %1242
    %1244 = vrot.lane.b32.xlu0 %v1180, 2
    %v1245 = vpop.permute.xlu0 %1244
    %1246 = vrot.lane.b32.xlu0 %v1182, 2
    %v1247 = vpop.permute.xlu0 %1246
    %1248 = vrot.lane.b32.xlu0 %v1184, 2
    %v1249 = vpop.permute.xlu0 %1248
    %1250 = vrot.lane.b32.xlu0 %v1186, 2
    %v1251 = vpop.permute.xlu0 %1250
    %1252 = vrot.lane.b32.xlu0 %v1188, 2
    %v1253 = vpop.permute.xlu0 %1252
    %1254 = vrot.lane.b32.xlu0 %v1190, 2
    %v1255 = vpop.permute.xlu0 %1254
    %1256 = vrot.lane.b32.xlu0 %v1192, 2
    %v1257 = vpop.permute.xlu0 %1256
    %1258 = vrot.lane.b32.xlu0 %v1194, 2
    %v1259 = vpop.permute.xlu0 %1258
    %1260 = vrot.lane.b32.xlu0 %v1196, 2
    %v1261 = vpop.permute.xlu0 %1260
    %1262 = vrot.lane.b32.xlu0 %v1198, 2
    %v1263 = vpop.permute.xlu0 %1262
    %1264 = vrot.lane.b32.xlu0 %v1200, 2
    %v1265 = vpop.permute.xlu0 %1264
    %1266 = vrot.lane.b32.xlu0 %v1202, 2
    %v1267 = vpop.permute.xlu0 %1266
    %1268 = vrot.lane.b32.xlu0 %v1204, 2
    %v1269 = vpop.permute.xlu0 %1268
    %1270 = vrot.lane.b32.xlu0 %v1206, 2
    %v1271 = vpop.permute.xlu0 %1270
    %1272 = vrot.lane.b32.xlu0 %v1145, 2
    %v1273 = vpop.permute.xlu0 %1272
    %1274 = vrot.lane.b32.xlu0 %v1147, 2
    %v1275 = vpop.permute.xlu0 %1274
    %1276 = vrot.lane.b32.xlu0 %v1149, 2
    %v1277 = vpop.permute.xlu0 %1276
    %1278 = vrot.lane.b32.xlu0 %v1151, 2
    %v1279 = vpop.permute.xlu0 %1278
    %1280 = vrot.lane.b32.xlu0 %v1153, 2
    %v1281 = vpop.permute.xlu0 %1280
    %1282 = vrot.lane.b32.xlu0 %v1155, 2
    %v1283 = vpop.permute.xlu0 %1282
    %1284 = vrot.lane.b32.xlu0 %v1157, 2
    %v1285 = vpop.permute.xlu0 %1284
    %1286 = vrot.lane.b32.xlu0 %v1159, 2
    %v1287 = vpop.permute.xlu0 %1286
    %1288 = vrot.lane.b32.xlu0 %v1161, 2
    %v1289 = vpop.permute.xlu0 %1288
    %1290 = vrot.lane.b32.xlu0 %v1163, 2
    %v1291 = vpop.permute.xlu0 %1290
    %1292 = vrot.lane.b32.xlu0 %v1165, 2
    %v1293 = vpop.permute.xlu0 %1292
    %1294 = vrot.lane.b32.xlu0 %v1167, 2
    %v1295 = vpop.permute.xlu0 %1294
    %1296 = vrot.lane.b32.xlu0 %v1169, 2
    %v1297 = vpop.permute.xlu0 %1296
    %1298 = vrot.lane.b32.xlu0 %v1171, 2
    %v1299 = vpop.permute.xlu0 %1298
    %1300 = vrot.lane.b32.xlu0 %v1173, 2
    %v1301 = vpop.permute.xlu0 %1300
    %1302 = vrot.lane.b32.xlu0 %v1175, 2
    %v1303 = vpop.permute.xlu0 %1302
    %1304 = vrot.lane.b32.xlu0 %v1177, 2
    %v1305 = vpop.permute.xlu0 %1304
    %1306 = vrot.lane.b32.xlu0 %v1179, 2
    %v1307 = vpop.permute.xlu0 %1306
    %1308 = vrot.lane.b32.xlu0 %v1181, 2
    %v1309 = vpop.permute.xlu0 %1308
    %1310 = vrot.lane.b32.xlu0 %v1183, 2
    %v1311 = vpop.permute.xlu0 %1310
    %1312 = vrot.lane.b32.xlu0 %v1185, 2
    %v1313 = vpop.permute.xlu0 %1312
    %1314 = vrot.lane.b32.xlu0 %v1187, 2
    %v1315 = vpop.permute.xlu0 %1314
    %1316 = vrot.lane.b32.xlu0 %v1189, 2
    %v1317 = vpop.permute.xlu0 %1316
    %1318 = vrot.lane.b32.xlu0 %v1191, 2
    %v1319 = vpop.permute.xlu0 %1318
    %1320 = vrot.lane.b32.xlu0 %v1193, 2
    %v1321 = vpop.permute.xlu0 %1320
    %1322 = vrot.lane.b32.xlu0 %v1195, 2
    %v1323 = vpop.permute.xlu0 %1322
    %1324 = vrot.lane.b32.xlu0 %v1197, 2
    %v1325 = vpop.permute.xlu0 %1324
    %1326 = vrot.lane.b32.xlu0 %v1199, 2
    %v1327 = vpop.permute.xlu0 %1326
    %1328 = vrot.lane.b32.xlu0 %v1201, 2
    %v1329 = vpop.permute.xlu0 %1328
    %1330 = vrot.lane.b32.xlu0 %v1203, 2
    %v1331 = vpop.permute.xlu0 %1330
    %1332 = vrot.lane.b32.xlu0 %v1205, 2
    %v1333 = vpop.permute.xlu0 %1332
    %1334 = vrot.lane.b32.xlu0 %v1207, 2
    %v1335 = vpop.permute.xlu0 %1334
    %vm1336 = vcmp.lt.s32.totalorder %v850, 2
    %v1337 = vsel %vm1336, %v1209, %v1273
    %v1338 = vsel %vm1336, %v1211, %v1275
    %v1339 = vsel %vm1336, %v1213, %v1277
    %v1340 = vsel %vm1336, %v1215, %v1279
    %v1341 = vsel %vm1336, %v1217, %v1281
    %v1342 = vsel %vm1336, %v1219, %v1283
    %v1343 = vsel %vm1336, %v1221, %v1285
    %v1344 = vsel %vm1336, %v1223, %v1287
    %v1345 = vsel %vm1336, %v1225, %v1289
    %v1346 = vsel %vm1336, %v1227, %v1291
    %v1347 = vsel %vm1336, %v1229, %v1293
    %v1348 = vsel %vm1336, %v1231, %v1295
    %v1349 = vsel %vm1336, %v1233, %v1297
    %v1350 = vsel %vm1336, %v1235, %v1299
    %v1351 = vsel %vm1336, %v1237, %v1301
    %v1352 = vsel %vm1336, %v1239, %v1303
    %v1353 = vsel %vm1336, %v1241, %v1305
    %v1354 = vsel %vm1336, %v1243, %v1307
    %v1355 = vsel %vm1336, %v1245, %v1309
    %v1356 = vsel %vm1336, %v1247, %v1311
    %v1357 = vsel %vm1336, %v1249, %v1313
    %v1358 = vsel %vm1336, %v1251, %v1315
    %v1359 = vsel %vm1336, %v1253, %v1317
    %v1360 = vsel %vm1336, %v1255, %v1319
    %v1361 = vsel %vm1336, %v1257, %v1321
    %v1362 = vsel %vm1336, %v1259, %v1323
    %v1363 = vsel %vm1336, %v1261, %v1325
    %v1364 = vsel %vm1336, %v1263, %v1327
    %v1365 = vsel %vm1336, %v1265, %v1329
    %v1366 = vsel %vm1336, %v1267, %v1331
    %v1367 = vsel %vm1336, %v1269, %v1333
    %v1368 = vsel %vm1336, %v1271, %v1335
    %v1369 = vsel %vm1336, %v1273, %v1209
    %v1370 = vsel %vm1336, %v1275, %v1211
    %v1371 = vsel %vm1336, %v1277, %v1213
    %v1372 = vsel %vm1336, %v1279, %v1215
    %v1373 = vsel %vm1336, %v1281, %v1217
    %v1374 = vsel %vm1336, %v1283, %v1219
    %v1375 = vsel %vm1336, %v1285, %v1221
    %v1376 = vsel %vm1336, %v1287, %v1223
    %v1377 = vsel %vm1336, %v1289, %v1225
    %v1378 = vsel %vm1336, %v1291, %v1227
    %v1379 = vsel %vm1336, %v1293, %v1229
    %v1380 = vsel %vm1336, %v1295, %v1231
    %v1381 = vsel %vm1336, %v1297, %v1233
    %v1382 = vsel %vm1336, %v1299, %v1235
    %v1383 = vsel %vm1336, %v1301, %v1237
    %v1384 = vsel %vm1336, %v1303, %v1239
    %v1385 = vsel %vm1336, %v1305, %v1241
    %v1386 = vsel %vm1336, %v1307, %v1243
    %v1387 = vsel %vm1336, %v1309, %v1245
    %v1388 = vsel %vm1336, %v1311, %v1247
    %v1389 = vsel %vm1336, %v1313, %v1249
    %v1390 = vsel %vm1336, %v1315, %v1251
    %v1391 = vsel %vm1336, %v1317, %v1253
    %v1392 = vsel %vm1336, %v1319, %v1255
    %v1393 = vsel %vm1336, %v1321, %v1257
    %v1394 = vsel %vm1336, %v1323, %v1259
    %v1395 = vsel %vm1336, %v1325, %v1261
    %v1396 = vsel %vm1336, %v1327, %v1263
    %v1397 = vsel %vm1336, %v1329, %v1265
    %v1398 = vsel %vm1336, %v1331, %v1267
    %v1399 = vsel %vm1336, %v1333, %v1269
    %v1400 = vsel %vm1336, %v1335, %v1271
    %v1401 = vadd.f32 %v916, %v1369
    %v1402 = vadd.f32 %v917, %v1337
    %v1403 = vadd.f32 %v918, %v1370
    %v1404 = vadd.f32 %v919, %v1338
    %v1405 = vadd.f32 %v920, %v1371
    %v1406 = vadd.f32 %v921, %v1339
    %v1407 = vadd.f32 %v922, %v1372
    %v1408 = vadd.f32 %v923, %v1340
    %v1409 = vadd.f32 %v924, %v1373
    %v1410 = vadd.f32 %v925, %v1341
    %v1411 = vadd.f32 %v926, %v1374
    %v1412 = vadd.f32 %v927, %v1342
    %v1413 = vadd.f32 %v928, %v1375
    %v1414 = vadd.f32 %v929, %v1343
    %v1415 = vadd.f32 %v930, %v1376
    %v1416 = vadd.f32 %v931, %v1344
    %v1417 = vadd.f32 %v932, %v1377
    %v1418 = vadd.f32 %v933, %v1345
    %v1419 = vadd.f32 %v934, %v1378
    %v1420 = vadd.f32 %v935, %v1346
    %v1421 = vadd.f32 %v936, %v1379
    %v1422 = vadd.f32 %v937, %v1347
    %v1423 = vadd.f32 %v938, %v1380
    %v1424 = vadd.f32 %v939, %v1348
    %v1425 = vadd.f32 %v940, %v1381
    %v1426 = vadd.f32 %v941, %v1349
    %v1427 = vadd.f32 %v942, %v1382
    %v1428 = vadd.f32 %v943, %v1350
    %v1429 = vadd.f32 %v944, %v1383
    %v1430 = vadd.f32 %v945, %v1351
    %v1431 = vadd.f32 %v946, %v1384
    %v1432 = vadd.f32 %v947, %v1352
    %v1433 = vadd.f32 %v948, %v1385
    %v1434 = vadd.f32 %v949, %v1353
    %v1435 = vadd.f32 %v950, %v1386
    %v1436 = vadd.f32 %v951, %v1354
    %v1437 = vadd.f32 %v952, %v1387
    %v1438 = vadd.f32 %v953, %v1355
    %v1439 = vadd.f32 %v954, %v1388
    %v1440 = vadd.f32 %v955, %v1356
    %v1441 = vadd.f32 %v956, %v1389
    %v1442 = vadd.f32 %v957, %v1357
    %v1443 = vadd.f32 %v958, %v1390
    %v1444 = vadd.f32 %v959, %v1358
    %v1445 = vadd.f32 %v960, %v1391
    %v1446 = vadd.f32 %v961, %v1359
    %v1447 = vadd.f32 %v962, %v1392
    %v1448 = vadd.f32 %v963, %v1360
    %v1449 = vadd.f32 %v964, %v1393
    %v1450 = vadd.f32 %v965, %v1361
    %v1451 = vadd.f32 %v966, %v1394
    %v1452 = vadd.f32 %v967, %v1362
    %v1453 = vadd.f32 %v968, %v1395
    %v1454 = vadd.f32 %v969, %v1363
    %v1455 = vadd.f32 %v970, %v1396
    %v1456 = vadd.f32 %v971, %v1364
    %v1457 = vadd.f32 %v972, %v1397
    %v1458 = vadd.f32 %v973, %v1365
    %v1459 = vadd.f32 %v974, %v1398
    %v1460 = vadd.f32 %v975, %v1366
    %v1461 = vadd.f32 %v976, %v1399
    %v1462 = vadd.f32 %v977, %v1367
    %v1463 = vadd.f32 %v978, %v1400
    %v1464 = vadd.f32 %v979, %v1368
    %v1465 = vlaneseq
    %v1466 = vshrl.u32 %v1465, 7
    %v1467 = vsub.s32 3, %v1466
    %v1468 = vrot.slane %v197, %v1467
    %v1469 = vlaneseq
    %v1470 = vshrl.u32 %v1469, 7
    %v1471 = vsub.s32 7, %v1470
    %v1472 = vrot.slane %v197, %v1471
    %v1475 = vlaneseq
    %v1476 = vshrl.u32 %v1475, 7
    %v1477 = vsub.s32 3, %v1476
    %v1478 = vrot.slane %v1468, %v1477
    %v1479 = vlaneseq
    %v1480 = vshrl.u32 %v1479, 7
    %v1481 = vsub.s32 3, %v1480
    %v1482 = vrot.slane %v1472, %v1481
    %v1483 = vmul.f32 %v69, %v1478
    %v1484 = vmul.f32 %v70, %v1482
    %v1485 = vmul.f32 %v71, %v1478
    %v1486 = vmul.f32 %v72, %v1482
    %v1487 = vmul.f32 %v73, %v1478
    %v1488 = vmul.f32 %v74, %v1482
    %v1489 = vmul.f32 %v75, %v1478
    %v1490 = vmul.f32 %v76, %v1482
    %v1491 = vmul.f32 %v77, %v1478
    %v1492 = vmul.f32 %v78, %v1482
    %v1493 = vmul.f32 %v79, %v1478
    %v1494 = vmul.f32 %v80, %v1482
    %v1495 = vmul.f32 %v81, %v1478
    %v1496 = vmul.f32 %v82, %v1482
    %v1497 = vmul.f32 %v83, %v1478
    %v1498 = vmul.f32 %v84, %v1482
    %v1499 = vmul.f32 %v85, %v1478
    %v1500 = vmul.f32 %v86, %v1482
    %v1501 = vmul.f32 %v87, %v1478
    %v1502 = vmul.f32 %v88, %v1482
    %v1503 = vmul.f32 %v89, %v1478
    %v1504 = vmul.f32 %v90, %v1482
    %v1505 = vmul.f32 %v91, %v1478
    %v1506 = vmul.f32 %v92, %v1482
    %v1507 = vmul.f32 %v93, %v1478
    %v1508 = vmul.f32 %v94, %v1482
    %v1509 = vmul.f32 %v95, %v1478
    %v1510 = vmul.f32 %v96, %v1482
    %v1511 = vmul.f32 %v97, %v1478
    %v1512 = vmul.f32 %v98, %v1482
    %v1513 = vmul.f32 %v99, %v1478
    %v1514 = vmul.f32 %v100, %v1482
    %v1515 = vmul.f32 %v101, %v1478
    %v1516 = vmul.f32 %v102, %v1482
    %v1517 = vmul.f32 %v103, %v1478
    %v1518 = vmul.f32 %v104, %v1482
    %v1519 = vmul.f32 %v105, %v1478
    %v1520 = vmul.f32 %v106, %v1482
    %v1521 = vmul.f32 %v107, %v1478
    %v1522 = vmul.f32 %v108, %v1482
    %v1523 = vmul.f32 %v109, %v1478
    %v1524 = vmul.f32 %v110, %v1482
    %v1525 = vmul.f32 %v111, %v1478
    %v1526 = vmul.f32 %v112, %v1482
    %v1527 = vmul.f32 %v113, %v1478
    %v1528 = vmul.f32 %v114, %v1482
    %v1529 = vmul.f32 %v115, %v1478
    %v1530 = vmul.f32 %v116, %v1482
    %v1531 = vmul.f32 %v117, %v1478
    %v1532 = vmul.f32 %v118, %v1482
    %v1533 = vmul.f32 %v119, %v1478
    %v1534 = vmul.f32 %v120, %v1482
    %v1535 = vmul.f32 %v121, %v1478
    %v1536 = vmul.f32 %v122, %v1482
    %v1537 = vmul.f32 %v123, %v1478
    %v1538 = vmul.f32 %v124, %v1482
    %v1539 = vmul.f32 %v125, %v1478
    %v1540 = vmul.f32 %v126, %v1482
    %v1541 = vmul.f32 %v127, %v1478
    %v1542 = vmul.f32 %v128, %v1482
    %v1543 = vmul.f32 %v129, %v1478
    %v1544 = vmul.f32 %v130, %v1482
    %v1545 = vmul.f32 %v131, %v1478
    %v1546 = vmul.f32 %v132, %v1482
    %v1547 = vlaneseq
    %v1548 = vshrl.u32 %v1547, 7
    %v1549 = vsub.s32 3, %v1548
    %v1550 = vrot.slane %v198, %v1549
    %v1551 = vlaneseq
    %v1552 = vshrl.u32 %v1551, 7
    %v1553 = vsub.s32 7, %v1552
    %v1554 = vrot.slane %v198, %v1553
    %v1557 = vlaneseq
    %v1558 = vshrl.u32 %v1557, 7
    %v1559 = vsub.s32 3, %v1558
    %v1560 = vrot.slane %v1550, %v1559
    %v1561 = vlaneseq
    %v1562 = vshrl.u32 %v1561, 7
    %v1563 = vsub.s32 3, %v1562
    %v1564 = vrot.slane %v1554, %v1563
    %v1565 = vmul.f32 %v133, %v1560
    %v1566 = vmul.f32 %v134, %v1564
    %v1567 = vmul.f32 %v135, %v1560
    %v1568 = vmul.f32 %v136, %v1564
    %v1569 = vmul.f32 %v137, %v1560
    %v1570 = vmul.f32 %v138, %v1564
    %v1571 = vmul.f32 %v139, %v1560
    %v1572 = vmul.f32 %v140, %v1564
    %v1573 = vmul.f32 %v141, %v1560
    %v1574 = vmul.f32 %v142, %v1564
    %v1575 = vmul.f32 %v143, %v1560
    %v1576 = vmul.f32 %v144, %v1564
    %v1577 = vmul.f32 %v145, %v1560
    %v1578 = vmul.f32 %v146, %v1564
    %v1579 = vmul.f32 %v147, %v1560
    %v1580 = vmul.f32 %v148, %v1564
    %v1581 = vmul.f32 %v149, %v1560
    %v1582 = vmul.f32 %v150, %v1564
    %v1583 = vmul.f32 %v151, %v1560
    %v1584 = vmul.f32 %v152, %v1564
    %v1585 = vmul.f32 %v153, %v1560
    %v1586 = vmul.f32 %v154, %v1564
    %v1587 = vmul.f32 %v155, %v1560
    %v1588 = vmul.f32 %v156, %v1564
    %v1589 = vmul.f32 %v157, %v1560
    %v1590 = vmul.f32 %v158, %v1564
    %v1591 = vmul.f32 %v159, %v1560
    %v1592 = vmul.f32 %v160, %v1564
    %v1593 = vmul.f32 %v161, %v1560
    %v1594 = vmul.f32 %v162, %v1564
    %v1595 = vmul.f32 %v163, %v1560
    %v1596 = vmul.f32 %v164, %v1564
    %v1597 = vmul.f32 %v165, %v1560
    %v1598 = vmul.f32 %v166, %v1564
    %v1599 = vmul.f32 %v167, %v1560
    %v1600 = vmul.f32 %v168, %v1564
    %v1601 = vmul.f32 %v169, %v1560
    %v1602 = vmul.f32 %v170, %v1564
    %v1603 = vmul.f32 %v171, %v1560
    %v1604 = vmul.f32 %v172, %v1564
    %v1605 = vmul.f32 %v173, %v1560
    %v1606 = vmul.f32 %v174, %v1564
    %v1607 = vmul.f32 %v175, %v1560
    %v1608 = vmul.f32 %v176, %v1564
    %v1609 = vmul.f32 %v177, %v1560
    %v1610 = vmul.f32 %v178, %v1564
    %v1611 = vmul.f32 %v179, %v1560
    %v1612 = vmul.f32 %v180, %v1564
    %v1613 = vmul.f32 %v181, %v1560
    %v1614 = vmul.f32 %v182, %v1564
    %v1615 = vmul.f32 %v183, %v1560
    %v1616 = vmul.f32 %v184, %v1564
    %v1617 = vmul.f32 %v185, %v1560
    %v1618 = vmul.f32 %v186, %v1564
    %v1619 = vmul.f32 %v187, %v1560
    %v1620 = vmul.f32 %v188, %v1564
    %v1621 = vmul.f32 %v189, %v1560
    %v1622 = vmul.f32 %v190, %v1564
    %v1623 = vmul.f32 %v191, %v1560
    %v1624 = vmul.f32 %v192, %v1564
    %v1625 = vmul.f32 %v193, %v1560
    %v1626 = vmul.f32 %v194, %v1564
    %v1627 = vmul.f32 %v195, %v1560
    %v1628 = vmul.f32 %v196, %v1564
    %v1629 = vadd.f32 %v1483, %v1565
    %v1630 = vadd.f32 %v1484, %v1566
    %v1631 = vadd.f32 %v1485, %v1567
    %v1632 = vadd.f32 %v1486, %v1568
    %v1633 = vadd.f32 %v1487, %v1569
    %v1634 = vadd.f32 %v1488, %v1570
    %v1635 = vadd.f32 %v1489, %v1571
    %v1636 = vadd.f32 %v1490, %v1572
    %v1637 = vadd.f32 %v1491, %v1573
    %v1638 = vadd.f32 %v1492, %v1574
    %v1639 = vadd.f32 %v1493, %v1575
    %v1640 = vadd.f32 %v1494, %v1576
    %v1641 = vadd.f32 %v1495, %v1577
    %v1642 = vadd.f32 %v1496, %v1578
    %v1643 = vadd.f32 %v1497, %v1579
    %v1644 = vadd.f32 %v1498, %v1580
    %v1645 = vadd.f32 %v1499, %v1581
    %v1646 = vadd.f32 %v1500, %v1582
    %v1647 = vadd.f32 %v1501, %v1583
    %v1648 = vadd.f32 %v1502, %v1584
    %v1649 = vadd.f32 %v1503, %v1585
    %v1650 = vadd.f32 %v1504, %v1586
    %v1651 = vadd.f32 %v1505, %v1587
    %v1652 = vadd.f32 %v1506, %v1588
    %v1653 = vadd.f32 %v1507, %v1589
    %v1654 = vadd.f32 %v1508, %v1590
    %v1655 = vadd.f32 %v1509, %v1591
    %v1656 = vadd.f32 %v1510, %v1592
    %v1657 = vadd.f32 %v1511, %v1593
    %v1658 = vadd.f32 %v1512, %v1594
    %v1659 = vadd.f32 %v1513, %v1595
    %v1660 = vadd.f32 %v1514, %v1596
    %v1661 = vadd.f32 %v1515, %v1597
    %v1662 = vadd.f32 %v1516, %v1598
    %v1663 = vadd.f32 %v1517, %v1599
    %v1664 = vadd.f32 %v1518, %v1600
    %v1665 = vadd.f32 %v1519, %v1601
    %v1666 = vadd.f32 %v1520, %v1602
    %v1667 = vadd.f32 %v1521, %v1603
    %v1668 = vadd.f32 %v1522, %v1604
    %v1669 = vadd.f32 %v1523, %v1605
    %v1670 = vadd.f32 %v1524, %v1606
    %v1671 = vadd.f32 %v1525, %v1607
    %v1672 = vadd.f32 %v1526, %v1608
    %v1673 = vadd.f32 %v1527, %v1609
    %v1674 = vadd.f32 %v1528, %v1610
    %v1675 = vadd.f32 %v1529, %v1611
    %v1676 = vadd.f32 %v1530, %v1612
    %v1677 = vadd.f32 %v1531, %v1613
    %v1678 = vadd.f32 %v1532, %v1614
    %v1679 = vadd.f32 %v1533, %v1615
    %v1680 = vadd.f32 %v1534, %v1616
    %v1681 = vadd.f32 %v1535, %v1617
    %v1682 = vadd.f32 %v1536, %v1618
    %v1683 = vadd.f32 %v1537, %v1619
    %v1684 = vadd.f32 %v1538, %v1620
    %v1685 = vadd.f32 %v1539, %v1621
    %v1686 = vadd.f32 %v1540, %v1622
    %v1687 = vadd.f32 %v1541, %v1623
    %v1688 = vadd.f32 %v1542, %v1624
    %v1689 = vadd.f32 %v1543, %v1625
    %v1690 = vadd.f32 %v1544, %v1626
    %v1691 = vadd.f32 %v1545, %v1627
    %v1692 = vadd.f32 %v1546, %v1628
    %1693 = vrot.lane.b32.xlu0 %v1629, 3
    %v1694 = vpop.permute.xlu0 %1693
    %1695 = vrot.lane.b32.xlu0 %v1631, 3
    %v1696 = vpop.permute.xlu0 %1695
    %1697 = vrot.lane.b32.xlu0 %v1633, 3
    %v1698 = vpop.permute.xlu0 %1697
    %1699 = vrot.lane.b32.xlu0 %v1635, 3
    %v1700 = vpop.permute.xlu0 %1699
    %1701 = vrot.lane.b32.xlu0 %v1637, 3
    %v1702 = vpop.permute.xlu0 %1701
    %1703 = vrot.lane.b32.xlu0 %v1639, 3
    %v1704 = vpop.permute.xlu0 %1703
    %1705 = vrot.lane.b32.xlu0 %v1641, 3
    %v1706 = vpop.permute.xlu0 %1705
    %1707 = vrot.lane.b32.xlu0 %v1643, 3
    %v1708 = vpop.permute.xlu0 %1707
    %1709 = vrot.lane.b32.xlu0 %v1645, 3
    %v1710 = vpop.permute.xlu0 %1709
    %1711 = vrot.lane.b32.xlu0 %v1647, 3
    %v1712 = vpop.permute.xlu0 %1711
    %1713 = vrot.lane.b32.xlu0 %v1649, 3
    %v1714 = vpop.permute.xlu0 %1713
    %1715 = vrot.lane.b32.xlu0 %v1651, 3
    %v1716 = vpop.permute.xlu0 %1715
    %1717 = vrot.lane.b32.xlu0 %v1653, 3
    %v1718 = vpop.permute.xlu0 %1717
    %1719 = vrot.lane.b32.xlu0 %v1655, 3
    %v1720 = vpop.permute.xlu0 %1719
    %1721 = vrot.lane.b32.xlu0 %v1657, 3
    %v1722 = vpop.permute.xlu0 %1721
    %1723 = vrot.lane.b32.xlu0 %v1659, 3
    %v1724 = vpop.permute.xlu0 %1723
    %1725 = vrot.lane.b32.xlu0 %v1661, 3
    %v1726 = vpop.permute.xlu0 %1725
    %1727 = vrot.lane.b32.xlu0 %v1663, 3
    %v1728 = vpop.permute.xlu0 %1727
    %1729 = vrot.lane.b32.xlu0 %v1665, 3
    %v1730 = vpop.permute.xlu0 %1729
    %1731 = vrot.lane.b32.xlu0 %v1667, 3
    %v1732 = vpop.permute.xlu0 %1731
    %1733 = vrot.lane.b32.xlu0 %v1669, 3
    %v1734 = vpop.permute.xlu0 %1733
    %1735 = vrot.lane.b32.xlu0 %v1671, 3
    %v1736 = vpop.permute.xlu0 %1735
    %1737 = vrot.lane.b32.xlu0 %v1673, 3
    %v1738 = vpop.permute.xlu0 %1737
    %1739 = vrot.lane.b32.xlu0 %v1675, 3
    %v1740 = vpop.permute.xlu0 %1739
    %1741 = vrot.lane.b32.xlu0 %v1677, 3
    %v1742 = vpop.permute.xlu0 %1741
    %1743 = vrot.lane.b32.xlu0 %v1679, 3
    %v1744 = vpop.permute.xlu0 %1743
    %1745 = vrot.lane.b32.xlu0 %v1681, 3
    %v1746 = vpop.permute.xlu0 %1745
    %1747 = vrot.lane.b32.xlu0 %v1683, 3
    %v1748 = vpop.permute.xlu0 %1747
    %1749 = vrot.lane.b32.xlu0 %v1685, 3
    %v1750 = vpop.permute.xlu0 %1749
    %1751 = vrot.lane.b32.xlu0 %v1687, 3
    %v1752 = vpop.permute.xlu0 %1751
    %1753 = vrot.lane.b32.xlu0 %v1689, 3
    %v1754 = vpop.permute.xlu0 %1753
    %1755 = vrot.lane.b32.xlu0 %v1691, 3
    %v1756 = vpop.permute.xlu0 %1755
    %1757 = vrot.lane.b32.xlu0 %v1630, 3
    %v1758 = vpop.permute.xlu0 %1757
    %1759 = vrot.lane.b32.xlu0 %v1632, 3
    %v1760 = vpop.permute.xlu0 %1759
    %1761 = vrot.lane.b32.xlu0 %v1634, 3
    %v1762 = vpop.permute.xlu0 %1761
    %1763 = vrot.lane.b32.xlu0 %v1636, 3
    %v1764 = vpop.permute.xlu0 %1763
    %1765 = vrot.lane.b32.xlu0 %v1638, 3
    %v1766 = vpop.permute.xlu0 %1765
    %1767 = vrot.lane.b32.xlu0 %v1640, 3
    %v1768 = vpop.permute.xlu0 %1767
    %1769 = vrot.lane.b32.xlu0 %v1642, 3
    %v1770 = vpop.permute.xlu0 %1769
    %1771 = vrot.lane.b32.xlu0 %v1644, 3
    %v1772 = vpop.permute.xlu0 %1771
    %1773 = vrot.lane.b32.xlu0 %v1646, 3
    %v1774 = vpop.permute.xlu0 %1773
    %1775 = vrot.lane.b32.xlu0 %v1648, 3
    %v1776 = vpop.permute.xlu0 %1775
    %1777 = vrot.lane.b32.xlu0 %v1650, 3
    %v1778 = vpop.permute.xlu0 %1777
    %1779 = vrot.lane.b32.xlu0 %v1652, 3
    %v1780 = vpop.permute.xlu0 %1779
    %1781 = vrot.lane.b32.xlu0 %v1654, 3
    %v1782 = vpop.permute.xlu0 %1781
    %1783 = vrot.lane.b32.xlu0 %v1656, 3
    %v1784 = vpop.permute.xlu0 %1783
    %1785 = vrot.lane.b32.xlu0 %v1658, 3
    %v1786 = vpop.permute.xlu0 %1785
    %1787 = vrot.lane.b32.xlu0 %v1660, 3
    %v1788 = vpop.permute.xlu0 %1787
    %1789 = vrot.lane.b32.xlu0 %v1662, 3
    %v1790 = vpop.permute.xlu0 %1789
    %1791 = vrot.lane.b32.xlu0 %v1664, 3
    %v1792 = vpop.permute.xlu0 %1791
    %1793 = vrot.lane.b32.xlu0 %v1666, 3
    %v1794 = vpop.permute.xlu0 %1793
    %1795 = vrot.lane.b32.xlu0 %v1668, 3
    %v1796 = vpop.permute.xlu0 %1795
    %1797 = vrot.lane.b32.xlu0 %v1670, 3
    %v1798 = vpop.permute.xlu0 %1797
    %1799 = vrot.lane.b32.xlu0 %v1672, 3
    %v1800 = vpop.permute.xlu0 %1799
    %1801 = vrot.lane.b32.xlu0 %v1674, 3
    %v1802 = vpop.permute.xlu0 %1801
    %1803 = vrot.lane.b32.xlu0 %v1676, 3
    %v1804 = vpop.permute.xlu0 %1803
    %1805 = vrot.lane.b32.xlu0 %v1678, 3
    %v1806 = vpop.permute.xlu0 %1805
    %1807 = vrot.lane.b32.xlu0 %v1680, 3
    %v1808 = vpop.permute.xlu0 %1807
    %1809 = vrot.lane.b32.xlu0 %v1682, 3
    %v1810 = vpop.permute.xlu0 %1809
    %1811 = vrot.lane.b32.xlu0 %v1684, 3
    %v1812 = vpop.permute.xlu0 %1811
    %1813 = vrot.lane.b32.xlu0 %v1686, 3
    %v1814 = vpop.permute.xlu0 %1813
    %1815 = vrot.lane.b32.xlu0 %v1688, 3
    %v1816 = vpop.permute.xlu0 %1815
    %1817 = vrot.lane.b32.xlu0 %v1690, 3
    %v1818 = vpop.permute.xlu0 %1817
    %1819 = vrot.lane.b32.xlu0 %v1692, 3
    %v1820 = vpop.permute.xlu0 %1819
    %vm1821 = vcmp.lt.s32.totalorder %v850, 3
    %v1822 = vsel %vm1821, %v1694, %v1758
    %v1823 = vsel %vm1821, %v1696, %v1760
    %v1824 = vsel %vm1821, %v1698, %v1762
    %v1825 = vsel %vm1821, %v1700, %v1764
    %v1826 = vsel %vm1821, %v1702, %v1766
    %v1827 = vsel %vm1821, %v1704, %v1768
    %v1828 = vsel %vm1821, %v1706, %v1770
    %v1829 = vsel %vm1821, %v1708, %v1772
    %v1830 = vsel %vm1821, %v1710, %v1774
    %v1831 = vsel %vm1821, %v1712, %v1776
    %v1832 = vsel %vm1821, %v1714, %v1778
    %v1833 = vsel %vm1821, %v1716, %v1780
    %v1834 = vsel %vm1821, %v1718, %v1782
    %v1835 = vsel %vm1821, %v1720, %v1784
    %v1836 = vsel %vm1821, %v1722, %v1786
    %v1837 = vsel %vm1821, %v1724, %v1788
    %v1838 = vsel %vm1821, %v1726, %v1790
    %v1839 = vsel %vm1821, %v1728, %v1792
    %v1840 = vsel %vm1821, %v1730, %v1794
    %v1841 = vsel %vm1821, %v1732, %v1796
    %v1842 = vsel %vm1821, %v1734, %v1798
    %v1843 = vsel %vm1821, %v1736, %v1800
    %v1844 = vsel %vm1821, %v1738, %v1802
    %v1845 = vsel %vm1821, %v1740, %v1804
    %v1846 = vsel %vm1821, %v1742, %v1806
    %v1847 = vsel %vm1821, %v1744, %v1808
    %v1848 = vsel %vm1821, %v1746, %v1810
    %v1849 = vsel %vm1821, %v1748, %v1812
    %v1850 = vsel %vm1821, %v1750, %v1814
    %v1851 = vsel %vm1821, %v1752, %v1816
    %v1852 = vsel %vm1821, %v1754, %v1818
    %v1853 = vsel %vm1821, %v1756, %v1820
    %v1854 = vsel %vm1821, %v1758, %v1694
    %v1855 = vsel %vm1821, %v1760, %v1696
    %v1856 = vsel %vm1821, %v1762, %v1698
    %v1857 = vsel %vm1821, %v1764, %v1700
    %v1858 = vsel %vm1821, %v1766, %v1702
    %v1859 = vsel %vm1821, %v1768, %v1704
    %v1860 = vsel %vm1821, %v1770, %v1706
    %v1861 = vsel %vm1821, %v1772, %v1708
    %v1862 = vsel %vm1821, %v1774, %v1710
    %v1863 = vsel %vm1821, %v1776, %v1712
    %v1864 = vsel %vm1821, %v1778, %v1714
    %v1865 = vsel %vm1821, %v1780, %v1716
    %v1866 = vsel %vm1821, %v1782, %v1718
    %v1867 = vsel %vm1821, %v1784, %v1720
    %v1868 = vsel %vm1821, %v1786, %v1722
    %v1869 = vsel %vm1821, %v1788, %v1724
    %v1870 = vsel %vm1821, %v1790, %v1726
    %v1871 = vsel %vm1821, %v1792, %v1728
    %v1872 = vsel %vm1821, %v1794, %v1730
    %v1873 = vsel %vm1821, %v1796, %v1732
    %v1874 = vsel %vm1821, %v1798, %v1734
    %v1875 = vsel %vm1821, %v1800, %v1736
    %v1876 = vsel %vm1821, %v1802, %v1738
    %v1877 = vsel %vm1821, %v1804, %v1740
    %v1878 = vsel %vm1821, %v1806, %v1742
    %v1879 = vsel %vm1821, %v1808, %v1744
    %v1880 = vsel %vm1821, %v1810, %v1746
    %v1881 = vsel %vm1821, %v1812, %v1748
    %v1882 = vsel %vm1821, %v1814, %v1750
    %v1883 = vsel %vm1821, %v1816, %v1752
    %v1884 = vsel %vm1821, %v1818, %v1754
    %v1885 = vsel %vm1821, %v1820, %v1756
    %v1886 = vadd.f32 %v1401, %v1854
    %v1887 = vadd.f32 %v1402, %v1822
    %v1888 = vadd.f32 %v1403, %v1855
    %v1889 = vadd.f32 %v1404, %v1823
    %v1890 = vadd.f32 %v1405, %v1856
    %v1891 = vadd.f32 %v1406, %v1824
    %v1892 = vadd.f32 %v1407, %v1857
    %v1893 = vadd.f32 %v1408, %v1825
    %v1894 = vadd.f32 %v1409, %v1858
    %v1895 = vadd.f32 %v1410, %v1826
    %v1896 = vadd.f32 %v1411, %v1859
    %v1897 = vadd.f32 %v1412, %v1827
    %v1898 = vadd.f32 %v1413, %v1860
    %v1899 = vadd.f32 %v1414, %v1828
    %v1900 = vadd.f32 %v1415, %v1861
    %v1901 = vadd.f32 %v1416, %v1829
    %v1902 = vadd.f32 %v1417, %v1862
    %v1903 = vadd.f32 %v1418, %v1830
    %v1904 = vadd.f32 %v1419, %v1863
    %v1905 = vadd.f32 %v1420, %v1831
    %v1906 = vadd.f32 %v1421, %v1864
    %v1907 = vadd.f32 %v1422, %v1832
    %v1908 = vadd.f32 %v1423, %v1865
    %v1909 = vadd.f32 %v1424, %v1833
    %v1910 = vadd.f32 %v1425, %v1866
    %v1911 = vadd.f32 %v1426, %v1834
    %v1912 = vadd.f32 %v1427, %v1867
    %v1913 = vadd.f32 %v1428, %v1835
    %v1914 = vadd.f32 %v1429, %v1868
    %v1915 = vadd.f32 %v1430, %v1836
    %v1916 = vadd.f32 %v1431, %v1869
    %v1917 = vadd.f32 %v1432, %v1837
    %v1918 = vadd.f32 %v1433, %v1870
    %v1919 = vadd.f32 %v1434, %v1838
    %v1920 = vadd.f32 %v1435, %v1871
    %v1921 = vadd.f32 %v1436, %v1839
    %v1922 = vadd.f32 %v1437, %v1872
    %v1923 = vadd.f32 %v1438, %v1840
    %v1924 = vadd.f32 %v1439, %v1873
    %v1925 = vadd.f32 %v1440, %v1841
    %v1926 = vadd.f32 %v1441, %v1874
    %v1927 = vadd.f32 %v1442, %v1842
    %v1928 = vadd.f32 %v1443, %v1875
    %v1929 = vadd.f32 %v1444, %v1843
    %v1930 = vadd.f32 %v1445, %v1876
    %v1931 = vadd.f32 %v1446, %v1844
    %v1932 = vadd.f32 %v1447, %v1877
    %v1933 = vadd.f32 %v1448, %v1845
    %v1934 = vadd.f32 %v1449, %v1878
    %v1935 = vadd.f32 %v1450, %v1846
    %v1936 = vadd.f32 %v1451, %v1879
    %v1937 = vadd.f32 %v1452, %v1847
    %v1938 = vadd.f32 %v1453, %v1880
    %v1939 = vadd.f32 %v1454, %v1848
    %v1940 = vadd.f32 %v1455, %v1881
    %v1941 = vadd.f32 %v1456, %v1849
    %v1942 = vadd.f32 %v1457, %v1882
    %v1943 = vadd.f32 %v1458, %v1850
    %v1944 = vadd.f32 %v1459, %v1883
    %v1945 = vadd.f32 %v1460, %v1851
    %v1946 = vadd.f32 %v1461, %v1884
    %v1947 = vadd.f32 %v1462, %v1852
    %v1948 = vadd.f32 %v1463, %v1885
    %v1949 = vadd.f32 %v1464, %v1853
    %1950 = vst [vmem:[#allocation10] sm:$0xff] %v1886
    %1951 = vst [vmem:[#allocation10 + $0x8] sm:$0xff] %v1887
    %1952 = vst [vmem:[#allocation10 + $0x10] sm:$0xff] %v1888
    %1953 = vst [vmem:[#allocation10 + $0x18] sm:$0xff] %v1889
    %1954 = vst [vmem:[#allocation10 + $0x20] sm:$0xff] %v1890
    %1955 = vst [vmem:[#allocation10 + $0x28] sm:$0xff] %v1891
    %1956 = vst [vmem:[#allocation10 + $0x30] sm:$0xff] %v1892
    %1957 = vst [vmem:[#allocation10 + $0x38] sm:$0xff] %v1893
    %1958 = vst [vmem:[#allocation10 + $0x40] sm:$0xff] %v1894
    %1959 = vst [vmem:[#allocation10 + $0x48] sm:$0xff] %v1895
    %1960 = vst [vmem:[#allocation10 + $0x50] sm:$0xff] %v1896
    %1961 = vst [vmem:[#allocation10 + $0x58] sm:$0xff] %v1897
    %1962 = vst [vmem:[#allocation10 + $0x60] sm:$0xff] %v1898
    %1963 = vst [vmem:[#allocation10 + $0x68] sm:$0xff] %v1899
    %1964 = vst [vmem:[#allocation10 + $0x70] sm:$0xff] %v1900
    %1965 = vst [vmem:[#allocation10 + $0x78] sm:$0xff] %v1901
    %1966 = vst [vmem:[#allocation10 + $0x80] sm:$0xff] %v1902
    %1967 = vst [vmem:[#allocation10 + $0x88] sm:$0xff] %v1903
    %1968 = vst [vmem:[#allocation10 + $0x90] sm:$0xff] %v1904
    %1969 = vst [vmem:[#allocation10 + $0x98] sm:$0xff] %v1905
    %1970 = vst [vmem:[#allocation10 + $0xa0] sm:$0xff] %v1906
    %1971 = vst [vmem:[#allocation10 + $0xa8] sm:$0xff] %v1907
    %1972 = vst [vmem:[#allocation10 + $0xb0] sm:$0xff] %v1908
    %1973 = vst [vmem:[#allocation10 + $0xb8] sm:$0xff] %v1909
    %1974 = vst [vmem:[#allocation10 + $0xc0] sm:$0xff] %v1910
    %1975 = vst [vmem:[#allocation10 + $0xc8] sm:$0xff] %v1911
    %1976 = vst [vmem:[#allocation10 + $0xd0] sm:$0xff] %v1912
    %1977 = vst [vmem:[#allocation10 + $0xd8] sm:$0xff] %v1913
    %1978 = vst [vmem:[#allocation10 + $0xe0] sm:$0xff] %v1914
    %1979 = vst [vmem:[#allocation10 + $0xe8] sm:$0xff] %v1915
    %1980 = vst [vmem:[#allocation10 + $0xf0] sm:$0xff] %v1916
    %1981 = vst [vmem:[#allocation10 + $0xf8] sm:$0xff] %v1917
    %1982 = vst [vmem:[#allocation10 + $0x100] sm:$0xff] %v1918
    %1983 = vst [vmem:[#allocation10 + $0x108] sm:$0xff] %v1919
    %1984 = vst [vmem:[#allocation10 + $0x110] sm:$0xff] %v1920
    %1985 = vst [vmem:[#allocation10 + $0x118] sm:$0xff] %v1921
    %1986 = vst [vmem:[#allocation10 + $0x120] sm:$0xff] %v1922
    %1987 = vst [vmem:[#allocation10 + $0x128] sm:$0xff] %v1923
    %1988 = vst [vmem:[#allocation10 + $0x130] sm:$0xff] %v1924
    %1989 = vst [vmem:[#allocation10 + $0x138] sm:$0xff] %v1925
    %1990 = vst [vmem:[#allocation10 + $0x140] sm:$0xff] %v1926
    %1991 = vst [vmem:[#allocation10 + $0x148] sm:$0xff] %v1927
    %1992 = vst [vmem:[#allocation10 + $0x150] sm:$0xff] %v1928
    %1993 = vst [vmem:[#allocation10 + $0x158] sm:$0xff] %v1929
    %1994 = vst [vmem:[#allocation10 + $0x160] sm:$0xff] %v1930
    %1995 = vst [vmem:[#allocation10 + $0x168] sm:$0xff] %v1931
    %1996 = vst [vmem:[#allocation10 + $0x170] sm:$0xff] %v1932
    %1997 = vst [vmem:[#allocation10 + $0x178] sm:$0xff] %v1933
    %1998 = vst [vmem:[#allocation10 + $0x180] sm:$0xff] %v1934
    %1999 = vst [vmem:[#allocation10 + $0x188] sm:$0xff] %v1935
    %2000 = vst [vmem:[#allocation10 + $0x190] sm:$0xff] %v1936
    %2001 = vst [vmem:[#allocation10 + $0x198] sm:$0xff] %v1937
    %2002 = vst [vmem:[#allocation10 + $0x1a0] sm:$0xff] %v1938
    %2003 = vst [vmem:[#allocation10 + $0x1a8] sm:$0xff] %v1939
    %2004 = vst [vmem:[#allocation10 + $0x1b0] sm:$0xff] %v1940
    %2005 = vst [vmem:[#allocation10 + $0x1b8] sm:$0xff] %v1941
    %2006 = vst [vmem:[#allocation10 + $0x1c0] sm:$0xff] %v1942
    %2007 = vst [vmem:[#allocation10 + $0x1c8] sm:$0xff] %v1943
    %2008 = vst [vmem:[#allocation10 + $0x1d0] sm:$0xff] %v1944
    %2009 = vst [vmem:[#allocation10 + $0x1d8] sm:$0xff] %v1945
    %2010 = vst [vmem:[#allocation10 + $0x1e0] sm:$0xff] %v1946
    %2011 = vst [vmem:[#allocation10 + $0x1e8] sm:$0xff] %v1947
    %2012 = vst [vmem:[#allocation10 + $0x1f0] sm:$0xff] %v1948
    %2013 = vst [vmem:[#allocation10 + $0x1f8] sm:$0xff] %v1949
    // Predicated region
    $region34: #{tpu_custom_call.1} parent=1 // pred_check
      _
    $region35: #{tpu_custom_call.1} parent=1 // pred_check_branch
      %2015 = sbr.rel (0) target = $region37
    $region36: #{tpu_custom_call.1} parent=1 // pred_region
      %s2017 = ssub.s32 8192, 8192
      %2018 = vsyncadd [#allocation4], %s2017
      %s2019 = sshll.u32 [#allocation10], 4
      %s2020 = int_to_ptr.vmem [resolvable:$true] %s2019
      %2025 = dma.vmem_to_hbm [thread:$0]  %s2020, 8192, %s4, [#allocation4], 256, 256, 16
    $region37: #{tpu_custom_call.1} parent=1 // pred_fallthru
      _
    // Predicated region
    $region38: #{tpu_custom_call.1} parent=1 // pred_check
      _
    $region39: #{tpu_custom_call.1} parent=1 // pred_check_branch
      %2027 = sbr.rel (0) target = $region41
    $region40: #{tpu_custom_call.1} parent=1 // pred_region
      %2028 = dma.done [#allocation4], 8192
    $region41: #{tpu_custom_call.1} parent=1 // pred_fallthru
      _
    %2029 = vsyncpa [#allocation3], 1
    %2030 = vsyncpa [#allocation6], 1
    %2031 = vsyncpa [#allocation9], 1
    %2032 = vsyncpa [#allocation4], 1

</llo_original>
